<compile_context>
chip_gen: v5e
topology: v5e:2x2
jax: 0.10.0
libtpu: 0.0.40
codegen_flags: <defaults>
</compile_context>

<pallas_src>
import functools

import jax
import jax.numpy as jnp
from jax import lax
from jax.experimental import pallas as pl
from jax.experimental.pallas import tpu as pltpu


def _round_up(n, m):
    return ((n + m - 1) // m) * m


def _nbytes(a):
    return a.size * a.dtype.itemsize


# --------------------------------------------------------------------------- #
# Kernels
# --------------------------------------------------------------------------- #
def _mlp_resident_kernel(x_ref, w_in_ref, b_in_ref, w_hid_ref, b_hid_ref,
                         w_out_ref, b_out_ref, o_ref, *,
                         n_hidden_layers, activation_dtype):
    """Whole MLP for one batch tile; all weights resident in VMEM.

    x_ref:     (TB, F_in_p)
    w_in_ref:  (F_in_p, H_p)     b_in_ref:  (1, H_p)      (biases f32)
    w_hid_ref: (L, H_p, H_p)     b_hid_ref: (L, 1, H_p)   (tiny dummies if L==0)
    w_out_ref: (H_p, F_out_p)    b_out_ref: (1, F_out_p)
    o_ref:     (TB, F_out_p)
    """
    mm = w_in_ref.dtype

    def act(y_f32):
        # f32 tanh by default (v5e has no bf16 EUP); callers on v6e/v7x can pass
        # activation_dtype=bf16 to halve EUP work for small H.
        return jnp.tanh(y_f32.astype(activation_dtype))

    h = act(jnp.dot(x_ref[...].astype(mm), w_in_ref[...],
                    preferred_element_type=jnp.float32) + b_in_ref[...])

    def hidden(hh, w, b):
        return act(jnp.dot(hh.astype(mm), w,
                           preferred_element_type=jnp.float32) + b)

    if n_hidden_layers <= 8:
        # Small/moderate L: full static unroll (best LLO scheduling visibility).
        for i in range(n_hidden_layers):
            h = hidden(h, w_hid_ref[i], b_hid_ref[i])
    else:
        # Deep stacks: partially unrolled fori_loop bounds vreg live ranges
        # while still giving the scheduler a 2-layer window.
        h = lax.fori_loop(
            0, n_hidden_layers,
            lambda i, hh: hidden(hh, w_hid_ref[i], b_hid_ref[i]),
            h, unroll=2)

    o_ref[...] = (jnp.dot(h.astype(mm), w_out_ref[...],
                          preferred_element_type=jnp.float32)
                  + b_out_ref[...]).astype(o_ref.dtype)


def _mlp_stream_kernel(x_ref, w_in_ref, b_in_ref, w_hid_ref, b_hid_ref,
                       w_out_ref, b_out_ref, o_ref, h_ref, *,
                       n_hidden_layers, activation_dtype):
    """Layer-streaming variant: grid = (batch_tiles, n_hidden_layers).

    One (H_p, H_p) hidden weight is DMA'd per grid step (double-buffered by the
    Pallas pipeline, so the next layer's weight DMA overlaps this layer's
    matmul); only the in/out projections stay resident.  The activation is
    carried across layer steps in a VMEM scratch (h_ref).
    """
    mm = w_in_ref.dtype
    j = pl.program_id(1)

    def act(y_f32):
        return jnp.tanh(y_f32.astype(activation_dtype)).astype(jnp.float32)

    @pl.when(j == 0)
    def _():
        h_ref[...] = act(jnp.dot(x_ref[...].astype(mm), w_in_ref[...],
                                 preferred_element_type=jnp.float32)
                         + b_in_ref[...])

    if n_hidden_layers > 0:   # static (streaming is only used when L > 0)
        h_ref[...] = act(jnp.dot(h_ref[...].astype(mm), w_hid_ref[0],
                                 preferred_element_type=jnp.float32)
                         + b_hid_ref[0])

    @pl.when(j == pl.num_programs(1) - 1)
    def _():
        o_ref[...] = (jnp.dot(h_ref[...].astype(mm), w_out_ref[...],
                              preferred_element_type=jnp.float32)
                      + b_out_ref[...]).astype(o_ref.dtype)


# --------------------------------------------------------------------------- #
# pallas_call builders
# --------------------------------------------------------------------------- #
def _weight_spec(shape, index_map, weight_pipeline):
    if weight_pipeline is None:
        return pl.BlockSpec(shape, index_map)
    # Constant index_map => block never changes; request a single VMEM buffer
    # instead of the default double-buffering (halves resident weight VMEM).
    return pl.BlockSpec(shape, index_map, pipeline_mode=weight_pipeline)


def _resident_call(x_p, w_in_p, b_in_p, w_hid_p, b_hid_p, w_out_p, b_out_p, *,
                   tb, n_hidden_layers, activation_dtype, vmem_limit,
                   out_dtype, cost, weight_pipeline):
    B_p, F_in_p = x_p.shape
    H_p = w_in_p.shape[1]
    F_out_p = w_out_p.shape[1]

    kernel = functools.partial(_mlp_resident_kernel,
                               n_hidden_layers=n_hidden_layers,
                               activation_dtype=activation_dtype)
    return pl.pallas_call(
        kernel,
        out_shape=jax.ShapeDtypeStruct((B_p, F_out_p), out_dtype),
        grid_spec=pltpu.PrefetchScalarGridSpec(
            num_scalar_prefetch=0,
            grid=(B_p // tb,),
            in_specs=[
                pl.BlockSpec((tb, F_in_p), lambda i: (i, 0)),
                _weight_spec((F_in_p, H_p), lambda i: (0, 0), weight_pipeline),
                _weight_spec((1, H_p), lambda i: (0, 0), weight_pipeline),
                _weight_spec(w_hid_p.shape, lambda i: (0, 0, 0), weight_pipeline),
                _weight_spec(b_hid_p.shape, lambda i: (0, 0, 0), weight_pipeline),
                _weight_spec((H_p, F_out_p), lambda i: (0, 0), weight_pipeline),
                _weight_spec((1, F_out_p), lambda i: (0, 0), weight_pipeline),
            ],
            out_specs=pl.BlockSpec((tb, F_out_p), lambda i: (i, 0)),
        ),
        compiler_params=pltpu.CompilerParams(
            dimension_semantics=("parallel",),
            vmem_limit_bytes=vmem_limit,
        ),
        cost_estimate=cost,
    )(x_p, w_in_p, b_in_p, w_hid_p, b_hid_p, w_out_p, b_out_p)


def _stream_call(x_p, w_in_p, b_in_p, w_hid_p, b_hid_p, w_out_p, b_out_p, *,
                 tb, n_hidden_layers, activation_dtype, vmem_limit,
                 out_dtype, cost, weight_pipeline):
    B_p, F_in_p = x_p.shape
    H_p = w_in_p.shape[1]
    F_out_p = w_out_p.shape[1]
    L = w_hid_p.shape[0]

    kernel = functools.partial(_mlp_stream_kernel,
                               n_hidden_layers=n_hidden_layers,
                               activation_dtype=activation_dtype)
    return pl.pallas_call(
        kernel,
        out_shape=jax.ShapeDtypeStruct((B_p, F_out_p), out_dtype),
        grid_spec=pltpu.PrefetchScalarGridSpec(
            num_scalar_prefetch=0,
            grid=(B_p // tb, L),
            in_specs=[
                pl.BlockSpec((tb, F_in_p), lambda i, j: (i, 0)),
                _weight_spec((F_in_p, H_p), lambda i, j: (0, 0), weight_pipeline),
                _weight_spec((1, H_p), lambda i, j: (0, 0), weight_pipeline),
                # Hidden layers stream one per grid step (default double-buffer
                # => next layer's weight DMA overlaps this layer's matmul).
                pl.BlockSpec((1, H_p, H_p), lambda i, j: (j, 0, 0)),
                pl.BlockSpec((1, 1, H_p), lambda i, j: (j, 0, 0)),
                _weight_spec((H_p, F_out_p), lambda i, j: (0, 0), weight_pipeline),
                _weight_spec((1, F_out_p), lambda i, j: (0, 0), weight_pipeline),
            ],
            out_specs=pl.BlockSpec((tb, F_out_p), lambda i, j: (i, 0)),
            scratch_shapes=[pltpu.VMEM((tb, H_p), jnp.float32)],
        ),
        compiler_params=pltpu.CompilerParams(
            dimension_semantics=("parallel", "arbitrary"),
            vmem_limit_bytes=vmem_limit,
        ),
        cost_estimate=cost,
    )(x_p, w_in_p, b_in_p, w_hid_p, b_hid_p, w_out_p, b_out_p)


# --------------------------------------------------------------------------- #
# Public wrapper
# --------------------------------------------------------------------------- #
def mlp_forward(x, params, *, n_hidden_layers, batch_tile=256,
                matmul_dtype=jnp.bfloat16, activation_dtype=jnp.float32,
                mode="auto"):
    """Pallas MLP forward.

    mode: "auto" (resident weights vs layer-streaming chosen from the VMEM
          budget), "resident", or "stream".
    matmul_dtype: bf16 for the MXU by default; pass jnp.float32 for closer
          parity with the f32 PyTorch reference.
    activation_dtype: f32 by default (safe on v5e); bf16 halves EUP work on
          v6e/v7x at a small accuracy cost.
    """
    w_in, b_in, w_hid, b_hid, w_out, b_out = params
    B, F_in = x.shape
    H = w_in.shape[1]
    F_out = w_out.shape[1]
    L = int(n_hidden_layers)

    # Lane / MXU padding (multiples of 128).
    F_in_p = _round_up(F_in, 128)
    H_p = _round_up(H, 128)
    F_out_p = _round_up(F_out, 128)

    # Batch tiling: fill the MXU M dim; keep >=2 grid steps whenever B >= 16 so
    # v7x's second TensorCore gets work from the 'parallel' axis.
    Bp8 = _round_up(B, 8)
    tb = _round_up(min(batch_tile, Bp8), 8)
    if Bp8 >= 16 and _round_up(B, tb) // tb < 2:
        tb = _round_up((Bp8 + 1) // 2, 8)
    B_p = _round_up(B, tb)

    # Keep a bf16 x bf16 (halves x DMA); everything else runs through f32.
    x_dtype = jnp.bfloat16 if x.dtype == jnp.bfloat16 else jnp.float32
    out_dtype = x_dtype

    def pad2(a, rows, cols, dtype):
        a = a.astype(dtype)
        return jnp.pad(a, ((0, rows - a.shape[0]), (0, cols - a.shape[1])))

    x_p = pad2(x, B_p, F_in_p, x_dtype)
    w_in_p = pad2(w_in, F_in_p, H_p, matmul_dtype)
    b_in_p = pad2(b_in, 1, H_p, jnp.float32)
    w_out_p = pad2(w_out, H_p, F_out_p, matmul_dtype)
    b_out_p = pad2(b_out, 1, F_out_p, jnp.float32)
    if L > 0:
        w_hid_p = jnp.pad(w_hid[:L].astype(matmul_dtype),
                          ((0, 0), (0, H_p - H), (0, H_p - H)))
        b_hid_p = jnp.pad(b_hid[:L].astype(jnp.float32),
                          ((0, 0), (0, 0), (0, H_p - H)))
    else:
        # Minimal dummies (never read when L == 0): avoids shipping a zeroed
        # (1, H_p, H_p) block to VMEM just to satisfy the kernel signature.
        w_hid_p = jnp.zeros((1, 8, 128), matmul_dtype)
        b_hid_p = jnp.zeros((1, 1, 128), jnp.float32)

    # --- generation-aware VMEM budget (v7x has only 64 MiB per TensorCore). --
    vmem_cap = 64 << 20                       # conservative default (v7x)
    try:
        vmem_cap = int(pltpu.get_tpu_info().vmem_capacity_bytes)
    except Exception:
        try:
            if "v7" not in jax.devices()[0].device_kind.lower():
                vmem_cap = 128 << 20          # v5e / v6e
        except Exception:
            pass
    vmem_budget = int(0.9 * vmem_cap)

    weight_bytes = (_nbytes(w_in_p) + _nbytes(b_in_p) + _nbytes(w_hid_p)
                    + _nbytes(b_hid_p) + _nbytes(w_out_p) + _nbytes(b_out_p))
    io_tile_bytes = tb * (F_in_p * jnp.dtype(x_dtype).itemsize
                          + F_out_p * jnp.dtype(out_dtype).itemsize)
    act_bytes = 4 * tb * H_p * 4              # h (f32) + cast / MXU staging headroom

    # Resident footprint assuming single-buffered weights + double-buffered I/O.
    resident_need = weight_bytes + 2 * io_tile_bytes + act_bytes + (4 << 20)

    if mode == "resident":
        use_stream = False
    elif mode == "stream":
        use_stream = L > 0
    else:
        use_stream = L > 0 and resident_need > vmem_budget

    if use_stream:
        layer_bytes = H_p * H_p * jnp.dtype(matmul_dtype).itemsize + H_p * 4
        proj_bytes = (_nbytes(w_in_p) + _nbytes(b_in_p)
                      + _nbytes(w_out_p) + _nbytes(b_out_p))
        need = (proj_bytes + 2 * layer_bytes + 2 * io_tile_bytes
                + tb * H_p * 4 + act_bytes + (4 << 20))
    else:
        # Leave room for double-buffered weights in case pl.Buffered(1) is
        # unavailable and we fall back to default pipelining.
        need = 2 * weight_bytes + 2 * io_tile_bytes + act_bytes + (8 << 20)
    vmem_limit = int(min(max(need, 32 << 20), vmem_budget))
    # TODO(synk): if a single (H_p, H_p) layer or the in/out projection alone
    # still exceeds the budget, add a K-dim tile axis inside the layer matmul.

    # Advisory cost estimate for XLA scheduling around the custom call.
    n_bt = B_p // tb
    flops = 2 * B_p * (F_in_p * H_p + L * H_p * H_p + H_p * F_out_p)
    transcendentals = B_p * H_p * (L + 1)
    hid_bytes = _nbytes(w_hid_p) + _nbytes(b_hid_p)
    bytes_accessed = (_nbytes(x_p) + _nbytes(w_in_p) + _nbytes(b_in_p)
                      + _nbytes(w_out_p) + _nbytes(b_out_p)
                      + (hid_bytes * n_bt if use_stream else hid_bytes)
                      + B_p * F_out_p * jnp.dtype(out_dtype).itemsize)
    cost = pl.CostEstimate(flops=int(flops),
                           transcendentals=int(transcendentals),
                           bytes_accessed=int(bytes_accessed))

    args = (x_p, w_in_p, b_in_p, w_hid_p, b_hid_p, w_out_p, b_out_p)
    kwargs = dict(tb=tb, n_hidden_layers=L, activation_dtype=activation_dtype,
                  vmem_limit=vmem_limit, out_dtype=out_dtype, cost=cost)
    call = _stream_call if use_stream else _resident_call

    try:
        # Single-buffer the block-invariant weights.
        out_p = call(*args, weight_pipeline=pl.Buffered(1), **kwargs)
    except Exception:
        # Fallback for jax builds without BlockSpec(pipeline_mode=...):
        # default double-buffered weights (vmem_limit above already covers it).
        out_p = call(*args, weight_pipeline=None, **kwargs)

    # Strip batch / lane padding.
    return out_p[:B, :F_out]


# --------------------------------------------------------------------------- #
# Reference + synthetic params
# --------------------------------------------------------------------------- #
def init_params(key, input_size, hidden_size, n_hidden_layers, out_size,
                dtype=jnp.float32):
    """Deterministic synthetic params (PyTorch-Linear-like fan-in scaling).
    Weights are stored pre-transposed as (in_features, out_features)."""
    ks = jax.random.split(key, 6)

    def uni(k, shape, fan_in):
        bound = 1.0 / jnp.sqrt(jnp.float32(fan_in))
        return jax.random.uniform(k, shape, dtype, -bound, bound)

    w_in = uni(ks[0], (input_size, hidden_size), input_size)
    b_in = uni(ks[1], (1, hidden_size), input_size)
    w_hid = uni(ks[2], (max(n_hidden_layers, 1), hidden_size, hidden_size),
                hidden_size)
    b_hid = uni(ks[3], (max(n_hidden_layers, 1), 1, hidden_size), hidden_size)
    w_out = uni(ks[4], (hidden_size, out_size), hidden_size)
    b_out = uni(ks[5], (1, out_size), hidden_size)
    return (w_in, b_in, w_hid, b_hid, w_out, b_out)


def mlp_reference(x, params, n_hidden_layers):
    """Pure-JAX f32 reference (matches the PyTorch module forward)."""
    w_in, b_in, w_hid, b_hid, w_out, b_out = params
    h = jnp.tanh(x @ w_in + b_in)
    for i in range(n_hidden_layers):
        h = jnp.tanh(h @ w_hid[i] + b_hid[i])
    return h @ w_out + b_out


if __name__ == "__main__":
    # Small shapes consistent with the module: x is (batch, input_size).
    batch = 16
    input_size = 4
    hidden_size = 32
    out_size = 3

    key = jax.random.PRNGKey(0)
    kx, kp = jax.random.split(key)
    x = jax.random.normal(kx, (batch, input_size), dtype=jnp.float32)

    # 1) Default path (resident weights), 2 hidden layers.
    n_hidden_layers = 2
    params = init_params(kp, input_size, hidden_size, n_hidden_layers, out_size)
    out = jax.block_until_ready(
        mlp_forward(x, params, n_hidden_layers=n_hidden_layers))
    ref = mlp_reference(x, params, n_hidden_layers)
    assert out.shape == (batch, out_size)
    # bf16 matmuls + f32 accumulation: tolerance loosened vs pure-f32 reference.
    assert jnp.allclose(out, ref, atol=3e-2, rtol=3e-2), "resident path mismatch"

    # 2) Layer-streaming path (what large H / L configs use on v7x's 64 MiB VMEM).
    out_s = jax.block_until_ready(
        mlp_forward(x, params, n_hidden_layers=n_hidden_layers, mode="stream"))
    assert jnp.allclose(out_s, ref, atol=3e-2, rtol=3e-2), "stream path mismatch"

    # 3) Deep stack -> partially-unrolled fori_loop branch.
    deep_L = 10
    params_d = init_params(kp, input_size, hidden_size, deep_L, out_size)
    out_d = jax.block_until_ready(
        mlp_forward(x, params_d, n_hidden_layers=deep_L))
    ref_d = mlp_reference(x, params_d, deep_L)
    assert jnp.allclose(out_d, ref_d, atol=5e-2, rtol=5e-2), "deep path mismatch"

    # 4) n_hidden_layers == 0 edge case (Linear -> tanh -> Linear).
    params0 = init_params(kp, input_size, hidden_size, 0, out_size)
    out0 = jax.block_until_ready(mlp_forward(x, params0, n_hidden_layers=0))
    ref0 = mlp_reference(x, params0, 0)
    assert jnp.allclose(out0, ref0, atol=3e-2, rtol=3e-2), "L=0 path mismatch"

    print("KERNEL_OK")
</pallas_src>

<mosaic_0001>
module attributes {stable_mosaic.version = 11 : i64} {
  func.func @_mlp_resident_kernel(%arg0: i32, %arg1: memref<8x128xf32, #tpu.memory_space<vmem>>, %arg2: memref<128x128xbf16, #tpu.memory_space<vmem>>, %arg3: memref<1x128xf32, #tpu.memory_space<vmem>>, %arg4: memref<2x128x128xbf16, #tpu.memory_space<vmem>>, %arg5: memref<2x1x128xf32, #tpu.memory_space<vmem>>, %arg6: memref<128x128xbf16, #tpu.memory_space<vmem>>, %arg7: memref<1x128xf32, #tpu.memory_space<vmem>>, %arg8: memref<8x128xf32, #tpu.memory_space<vmem>>) attributes {dimension_semantics = [#tpu.dimension_semantics<parallel>], iteration_bounds = array<i64: 2>, scalar_prefetch = 0 : i64, scratch_operands = 0 : i64, tpu.core_type = #tpu.core_type<tc>, window_params = [{transform_indices = @transform_0, window_bounds = array<i64: 8, 128>}, {pipeline_mode = #tpu.pipeline_mode<synchronous>, transform_indices = @transform_1, window_bounds = array<i64: 128, 128>}, {pipeline_mode = #tpu.pipeline_mode<synchronous>, transform_indices = @transform_2, window_bounds = array<i64: 1, 128>}, {pipeline_mode = #tpu.pipeline_mode<synchronous>, transform_indices = @transform_3, window_bounds = array<i64: 2, 128, 128>}, {pipeline_mode = #tpu.pipeline_mode<synchronous>, transform_indices = @transform_4, window_bounds = array<i64: 2, 1, 128>}, {pipeline_mode = #tpu.pipeline_mode<synchronous>, transform_indices = @transform_5, window_bounds = array<i64: 128, 128>}, {pipeline_mode = #tpu.pipeline_mode<synchronous>, transform_indices = @transform_6, window_bounds = array<i64: 1, 128>}, {transform_indices = @transform_7, window_bounds = array<i64: 8, 128>}]} {
    %c0 = arith.constant 0 : index
    %c0_0 = arith.constant 0 : index
    %0 = vector.load %arg1[%c0, %c0_0] : memref<8x128xf32, #tpu.memory_space<vmem>>, vector<8x128xf32>
    %1 = arith.truncf %0 : vector<8x128xf32> to vector<8x128xbf16>
    %c0_1 = arith.constant 0 : index
    %c0_2 = arith.constant 0 : index
    %2 = vector.load %arg2[%c0_1, %c0_2] : memref<128x128xbf16, #tpu.memory_space<vmem>>, vector<128x128xbf16>
    %cst = arith.constant dense<0.000000e+00> : vector<8x128xf32>
    %3 = tpu.matmul %1, %2, %cst {dimension_numbers = #tpu.dot_dimension_numbers<[1], [0], [0], [1], [0, 0, 1, 1], [], []>} : vector<8x128xbf16>, vector<128x128xbf16>, vector<8x128xf32> -> vector<8x128xf32>
    %c0_3 = arith.constant 0 : index
    %c0_4 = arith.constant 0 : index
    %4 = vector.load %arg3[%c0_3, %c0_4] : memref<1x128xf32, #tpu.memory_space<vmem>>, vector<1x128xf32>
    %5 = vector.broadcast %4 : vector<1x128xf32> to vector<8x128xf32>
    %6 = arith.addf %3, %5 : vector<8x128xf32>
    %7 = math.tanh %6 : vector<8x128xf32>
    %c0_5 = arith.constant 0 : index
    %c0_6 = arith.constant 0 : index
    %c0_7 = arith.constant 0 : index
    %8 = vector.load %arg4[%c0_5, %c0_6, %c0_7] : memref<2x128x128xbf16, #tpu.memory_space<vmem>>, vector<1x128x128xbf16>
    %9 = vector.shape_cast %8 : vector<1x128x128xbf16> to vector<128x128xbf16>
    %c0_8 = arith.constant 0 : index
    %c0_9 = arith.constant 0 : index
    %c0_10 = arith.constant 0 : index
    %10 = vector.load %arg5[%c0_8, %c0_9, %c0_10] : memref<2x1x128xf32, #tpu.memory_space<vmem>>, vector<1x1x128xf32>
    %11 = vector.shape_cast %10 : vector<1x1x128xf32> to vector<1x128xf32>
    %12 = arith.truncf %7 : vector<8x128xf32> to vector<8x128xbf16>
    %cst_11 = arith.constant dense<0.000000e+00> : vector<8x128xf32>
    %13 = tpu.matmul %12, %9, %cst_11 {dimension_numbers = #tpu.dot_dimension_numbers<[1], [0], [0], [1], [0, 0, 1, 1], [], []>} : vector<8x128xbf16>, vector<128x128xbf16>, vector<8x128xf32> -> vector<8x128xf32>
    %14 = vector.broadcast %11 : vector<1x128xf32> to vector<8x128xf32>
    %15 = arith.addf %13, %14 : vector<8x128xf32>
    %16 = math.tanh %15 : vector<8x128xf32>
    %c1 = arith.constant 1 : index
    %c0_12 = arith.constant 0 : index
    %c0_13 = arith.constant 0 : index
    %17 = vector.load %arg4[%c1, %c0_12, %c0_13] : memref<2x128x128xbf16, #tpu.memory_space<vmem>>, vector<1x128x128xbf16>
    %18 = vector.shape_cast %17 : vector<1x128x128xbf16> to vector<128x128xbf16>
    %c1_14 = arith.constant 1 : index
    %c0_15 = arith.constant 0 : index
    %c0_16 = arith.constant 0 : index
    %19 = vector.load %arg5[%c1_14, %c0_15, %c0_16] : memref<2x1x128xf32, #tpu.memory_space<vmem>>, vector<1x1x128xf32>
    %20 = vector.shape_cast %19 : vector<1x1x128xf32> to vector<1x128xf32>
    %21 = arith.truncf %16 : vector<8x128xf32> to vector<8x128xbf16>
    %cst_17 = arith.constant dense<0.000000e+00> : vector<8x128xf32>
    %22 = tpu.matmul %21, %18, %cst_17 {dimension_numbers = #tpu.dot_dimension_numbers<[1], [0], [0], [1], [0, 0, 1, 1], [], []>} : vector<8x128xbf16>, vector<128x128xbf16>, vector<8x128xf32> -> vector<8x128xf32>
    %23 = vector.broadcast %20 : vector<1x128xf32> to vector<8x128xf32>
    %24 = arith.addf %22, %23 : vector<8x128xf32>
    %25 = math.tanh %24 : vector<8x128xf32>
    %26 = arith.truncf %25 : vector<8x128xf32> to vector<8x128xbf16>
    %c0_18 = arith.constant 0 : index
    %c0_19 = arith.constant 0 : index
    %27 = vector.load %arg6[%c0_18, %c0_19] : memref<128x128xbf16, #tpu.memory_space<vmem>>, vector<128x128xbf16>
    %cst_20 = arith.constant dense<0.000000e+00> : vector<8x128xf32>
    %28 = tpu.matmul %26, %27, %cst_20 {dimension_numbers = #tpu.dot_dimension_numbers<[1], [0], [0], [1], [0, 0, 1, 1], [], []>} : vector<8x128xbf16>, vector<128x128xbf16>, vector<8x128xf32> -> vector<8x128xf32>
    %c0_21 = arith.constant 0 : index
    %c0_22 = arith.constant 0 : index
    %29 = vector.load %arg7[%c0_21, %c0_22] : memref<1x128xf32, #tpu.memory_space<vmem>>, vector<1x128xf32>
    %30 = vector.broadcast %29 : vector<1x128xf32> to vector<8x128xf32>
    %31 = arith.addf %28, %30 : vector<8x128xf32>
    %c0_23 = arith.constant 0 : index
    %c0_24 = arith.constant 0 : index
    %32 = vector.load %arg8[%c0_23, %c0_24] : memref<8x128xf32, #tpu.memory_space<vmem>>, vector<8x128xf32>
    tpu.vector_store %arg8[%c0_23, %c0_24], %31 {strides = array<i32>} : memref<8x128xf32, #tpu.memory_space<vmem>>, vector<8x128xf32>,
    return
  }
  func.func @transform_0(%arg0: i32) -> (i32, i32) {
    %c0_i32 = arith.constant 0 : i32
    %c0_i32_0 = arith.constant 0 : i32
    return %arg0, %c0_i32 : i32, i32
  }
  func.func @transform_1(%arg0: i32) -> (i32, i32) {
    %c0_i32 = arith.constant 0 : i32
    %c0_i32_0 = arith.constant 0 : i32
    %c0_i32_1 = arith.constant 0 : i32
    return %c0_i32, %c0_i32_0 : i32, i32
  }
  func.func @transform_2(%arg0: i32) -> (i32, i32) {
    %c0_i32 = arith.constant 0 : i32
    %c0_i32_0 = arith.constant 0 : i32
    %c0_i32_1 = arith.constant 0 : i32
    return %c0_i32, %c0_i32_0 : i32, i32
  }
  func.func @transform_3(%arg0: i32) -> (i32, i32, i32) {
    %c0_i32 = arith.constant 0 : i32
    %c0_i32_0 = arith.constant 0 : i32
    %c0_i32_1 = arith.constant 0 : i32
    %c0_i32_2 = arith.constant 0 : i32
    return %c0_i32, %c0_i32_0, %c0_i32_1 : i32, i32, i32
  }
  func.func @transform_4(%arg0: i32) -> (i32, i32, i32) {
    %c0_i32 = arith.constant 0 : i32
    %c0_i32_0 = arith.constant 0 : i32
    %c0_i32_1 = arith.constant 0 : i32
    %c0_i32_2 = arith.constant 0 : i32
    return %c0_i32, %c0_i32_0, %c0_i32_1 : i32, i32, i32
  }
  func.func @transform_5(%arg0: i32) -> (i32, i32) {
    %c0_i32 = arith.constant 0 : i32
    %c0_i32_0 = arith.constant 0 : i32
    %c0_i32_1 = arith.constant 0 : i32
    return %c0_i32, %c0_i32_0 : i32, i32
  }
  func.func @transform_6(%arg0: i32) -> (i32, i32) {
    %c0_i32 = arith.constant 0 : i32
    %c0_i32_0 = arith.constant 0 : i32
    %c0_i32_1 = arith.constant 0 : i32
    return %c0_i32, %c0_i32_0 : i32, i32
  }
  func.func @transform_7(%arg0: i32) -> (i32, i32) {
    %c0_i32 = arith.constant 0 : i32
    %c0_i32_0 = arith.constant 0 : i32
    return %arg0, %c0_i32 : i32, i32
  }
}

module attributes {stable_mosaic.version = 11 : i64} {
  func.func @_mlp_resident_kernel(%arg0: i32, %arg1: memref<8x128xf32, #tpu.memory_space<vmem>>, %arg2: memref<128x128xbf16, #tpu.memory_space<vmem>>, %arg3: memref<1x128xf32, #tpu.memory_space<vmem>>, %arg4: memref<2x128x128xbf16, #tpu.memory_space<vmem>>, %arg5: memref<2x1x128xf32, #tpu.memory_space<vmem>>, %arg6: memref<128x128xbf16, #tpu.memory_space<vmem>>, %arg7: memref<1x128xf32, #tpu.memory_space<vmem>>, %arg8: memref<8x128xf32, #tpu.memory_space<vmem>>) attributes {dimension_semantics = [#tpu.dimension_semantics<parallel>], iteration_bounds = array<i64: 2>, scalar_prefetch = 0 : i64, scratch_operands = 0 : i64, tpu.core_type = #tpu.core_type<tc>, window_params = [{transform_indices = @transform_0, window_bounds = array<i64: 8, 128>}, {pipeline_mode = #tpu.pipeline_mode<synchronous>, transform_indices = @transform_1, window_bounds = array<i64: 128, 128>}, {pipeline_mode = #tpu.pipeline_mode<synchronous>, transform_indices = @transform_2, window_bounds = array<i64: 1, 128>}, {pipeline_mode = #tpu.pipeline_mode<synchronous>, transform_indices = @transform_3, window_bounds = array<i64: 2, 128, 128>}, {pipeline_mode = #tpu.pipeline_mode<synchronous>, transform_indices = @transform_4, window_bounds = array<i64: 2, 1, 128>}, {pipeline_mode = #tpu.pipeline_mode<synchronous>, transform_indices = @transform_5, window_bounds = array<i64: 128, 128>}, {pipeline_mode = #tpu.pipeline_mode<synchronous>, transform_indices = @transform_6, window_bounds = array<i64: 1, 128>}, {transform_indices = @transform_7, window_bounds = array<i64: 8, 128>}]} {
    %c0 = arith.constant 0 : index
    %c0_0 = arith.constant 0 : index
    %0 = vector.load %arg1[%c0, %c0_0] : memref<8x128xf32, #tpu.memory_space<vmem>>, vector<8x128xf32>
    %1 = arith.truncf %0 : vector<8x128xf32> to vector<8x128xbf16>
    %c0_1 = arith.constant 0 : index
    %c0_2 = arith.constant 0 : index
    %2 = vector.load %arg2[%c0_1, %c0_2] : memref<128x128xbf16, #tpu.memory_space<vmem>>, vector<128x128xbf16>
    %cst = arith.constant dense<0.000000e+00> : vector<8x128xf32>
    %3 = tpu.matmul %1, %2, %cst {dimension_numbers = #tpu.dot_dimension_numbers<[1], [0], [0], [1], [0, 0, 1, 1], [], []>} : vector<8x128xbf16>, vector<128x128xbf16>, vector<8x128xf32> -> vector<8x128xf32>
    %c0_3 = arith.constant 0 : index
    %c0_4 = arith.constant 0 : index
    %4 = vector.load %arg3[%c0_3, %c0_4] : memref<1x128xf32, #tpu.memory_space<vmem>>, vector<1x128xf32>
    %5 = vector.broadcast %4 : vector<1x128xf32> to vector<8x128xf32>
    %6 = arith.addf %3, %5 : vector<8x128xf32>
    %7 = math.tanh %6 : vector<8x128xf32>
    %c0_5 = arith.constant 0 : index
    %c0_6 = arith.constant 0 : index
    %c0_7 = arith.constant 0 : index
    %8 = vector.load %arg4[%c0_5, %c0_6, %c0_7] : memref<2x128x128xbf16, #tpu.memory_space<vmem>>, vector<1x128x128xbf16>
    %9 = vector.shape_cast %8 : vector<1x128x128xbf16> to vector<128x128xbf16>
    %c0_8 = arith.constant 0 : index
    %c0_9 = arith.constant 0 : index
    %c0_10 = arith.constant 0 : index
    %10 = vector.load %arg5[%c0_8, %c0_9, %c0_10] : memref<2x1x128xf32, #tpu.memory_space<vmem>>, vector<1x1x128xf32>
    %11 = vector.shape_cast %10 : vector<1x1x128xf32> to vector<1x128xf32>
    %12 = arith.truncf %7 : vector<8x128xf32> to vector<8x128xbf16>
    %cst_11 = arith.constant dense<0.000000e+00> : vector<8x128xf32>
    %13 = tpu.matmul %12, %9, %cst_11 {dimension_numbers = #tpu.dot_dimension_numbers<[1], [0], [0], [1], [0, 0, 1, 1], [], []>} : vector<8x128xbf16>, vector<128x128xbf16>, vector<8x128xf32> -> vector<8x128xf32>
    %14 = vector.broadcast %11 : vector<1x128xf32> to vector<8x128xf32>
    %15 = arith.addf %13, %14 : vector<8x128xf32>
    %16 = math.tanh %15 : vector<8x128xf32>
    %c1 = arith.constant 1 : index
    %c0_12 = arith.constant 0 : index
    %c0_13 = arith.constant 0 : index
    %17 = vector.load %arg4[%c1, %c0_12, %c0_13] : memref<2x128x128xbf16, #tpu.memory_space<vmem>>, vector<1x128x128xbf16>
    %18 = vector.shape_cast %17 : vector<1x128x128xbf16> to vector<128x128xbf16>
    %c1_14 = arith.constant 1 : index
    %c0_15 = arith.constant 0 : index
    %c0_16 = arith.constant 0 : index
    %19 = vector.load %arg5[%c1_14, %c0_15, %c0_16] : memref<2x1x128xf32, #tpu.memory_space<vmem>>, vector<1x1x128xf32>
    %20 = vector.shape_cast %19 : vector<1x1x128xf32> to vector<1x128xf32>
    %21 = arith.truncf %16 : vector<8x128xf32> to vector<8x128xbf16>
    %cst_17 = arith.constant dense<0.000000e+00> : vector<8x128xf32>
    %22 = tpu.matmul %21, %18, %cst_17 {dimension_numbers = #tpu.dot_dimension_numbers<[1], [0], [0], [1], [0, 0, 1, 1], [], []>} : vector<8x128xbf16>, vector<128x128xbf16>, vector<8x128xf32> -> vector<8x128xf32>
    %23 = vector.broadcast %20 : vector<1x128xf32> to vector<8x128xf32>
    %24 = arith.addf %22, %23 : vector<8x128xf32>
    %25 = math.tanh %24 : vector<8x128xf32>
    %26 = arith.truncf %25 : vector<8x128xf32> to vector<8x128xbf16>
    %c0_18 = arith.constant 0 : index
    %c0_19 = arith.constant 0 : index
    %27 = vector.load %arg6[%c0_18, %c0_19] : memref<128x128xbf16, #tpu.memory_space<vmem>>, vector<128x128xbf16>
    %cst_20 = arith.constant dense<0.000000e+00> : vector<8x128xf32>
    %28 = tpu.matmul %26, %27, %cst_20 {dimension_numbers = #tpu.dot_dimension_numbers<[1], [0], [0], [1], [0, 0, 1, 1], [], []>} : vector<8x128xbf16>, vector<128x128xbf16>, vector<8x128xf32> -> vector<8x128xf32>
    %c0_21 = arith.constant 0 : index
    %c0_22 = arith.constant 0 : index
    %29 = vector.load %arg7[%c0_21, %c0_22] : memref<1x128xf32, #tpu.memory_space<vmem>>, vector<1x128xf32>
    %30 = vector.broadcast %29 : vector<1x128xf32> to vector<8x128xf32>
    %31 = arith.addf %28, %30 : vector<8x128xf32>
    %c0_23 = arith.constant 0 : index
    %c0_24 = arith.constant 0 : index
    %32 = vector.load %arg8[%c0_23, %c0_24] : memref<8x128xf32, #tpu.memory_space<vmem>>, vector<8x128xf32>
    tpu.vector_store %arg8[%c0_23, %c0_24], %31 {strides = array<i32>} : memref<8x128xf32, #tpu.memory_space<vmem>>, vector<8x128xf32>,
    return
  }
  func.func @transform_0(%arg0: i32) -> (i32, i32) {
    %c0_i32 = arith.constant 0 : i32
    %c0_i32_0 = arith.constant 0 : i32
    return %arg0, %c0_i32 : i32, i32
  }
  func.func @transform_1(%arg0: i32) -> (i32, i32) {
    %c0_i32 = arith.constant 0 : i32
    %c0_i32_0 = arith.constant 0 : i32
    %c0_i32_1 = arith.constant 0 : i32
    return %c0_i32, %c0_i32_0 : i32, i32
  }
  func.func @transform_2(%arg0: i32) -> (i32, i32) {
    %c0_i32 = arith.constant 0 : i32
    %c0_i32_0 = arith.constant 0 : i32
    %c0_i32_1 = arith.constant 0 : i32
    return %c0_i32, %c0_i32_0 : i32, i32
  }
  func.func @transform_3(%arg0: i32) -> (i32, i32, i32) {
    %c0_i32 = arith.constant 0 : i32
    %c0_i32_0 = arith.constant 0 : i32
    %c0_i32_1 = arith.constant 0 : i32
    %c0_i32_2 = arith.constant 0 : i32
    return %c0_i32, %c0_i32_0, %c0_i32_1 : i32, i32, i32
  }
  func.func @transform_4(%arg0: i32) -> (i32, i32, i32) {
    %c0_i32 = arith.constant 0 : i32
    %c0_i32_0 = arith.constant 0 : i32
    %c0_i32_1 = arith.constant 0 : i32
    %c0_i32_2 = arith.constant 0 : i32
    return %c0_i32, %c0_i32_0, %c0_i32_1 : i32, i32, i32
  }
  func.func @transform_5(%arg0: i32) -> (i32, i32) {
    %c0_i32 = arith.constant 0 : i32
    %c0_i32_0 = arith.constant 0 : i32
    %c0_i32_1 = arith.constant 0 : i32
    return %c0_i32, %c0_i32_0 : i32, i32
  }
  func.func @transform_6(%arg0: i32) -> (i32, i32) {
    %c0_i32 = arith.constant 0 : i32
    %c0_i32_0 = arith.constant 0 : i32
    %c0_i32_1 = arith.constant 0 : i32
    return %c0_i32, %c0_i32_0 : i32, i32
  }
  func.func @transform_7(%arg0: i32) -> (i32, i32) {
    %c0_i32 = arith.constant 0 : i32
    %c0_i32_0 = arith.constant 0 : i32
    return %arg0, %c0_i32 : i32, i32
  }
}

</mosaic_0001>

<llo_original>
// kernel: tpu_custom_call.1
$region0: #{tpu_custom_call.1}
  #allocation0 [shape = 'u32[]', space=smem, size = 0x4, offset = 0x4, fixed_abs, tag = 'smem constant byte address 0x4 - core index']
  #allocation1 [shape = 'u32[72,128]{1,0:T(1,128)}', space=vmem, size = 0x9000, scoped, tag = 'internal scratch']
  %s0 = inlined_call_operand.hbm [shape: f32[16,128], index: 0, kind: input, shape index: {}]
  %s1 = inlined_call_operand.hbm [shape: bf16[128,128], index: 1, kind: input, shape index: {}]
  %s2 = inlined_call_operand.vmem [shape: f32[1,128], index: 2, kind: input, shape index: {}]
  %s3 = inlined_call_operand.hbm [shape: bf16[2,128,128], index: 3, kind: input, shape index: {}]
  %s4 = inlined_call_operand.vmem [shape: f32[2,1,128], index: 4, kind: input, shape index: {}]
  %s5 = inlined_call_operand.hbm [shape: bf16[128,128], index: 5, kind: input, shape index: {}]
  %s6 = inlined_call_operand.vmem [shape: f32[1,128], index: 6, kind: input, shape index: {}]
  %s7 = inlined_call_operand.hbm [shape: f32[16,128], index: 7, kind: output, shape index: {}]
  %s8 = sld [smem:[#allocation0]]
  $region77: #{tpu_custom_call.1} parent=0
    _
  %s10 = ssub.s32 1, %s8
  %s11 = scalar_select 0, %s10, %s8
  $region1: #{tpu_custom_call.1} parent=0
    #allocation2 [shape = 'u8[8192]{0}', space=vmem, size = 0x2000, scoped, tag = 'input window, operand 0']
    #allocation3 [shape = 's32[2]{0}', space=sflag, size = 0x8, scoped, tag = 'scoped memory for tpu_custom_call.1']
    #allocation4 [shape = 's32[2]{0}', space=sflag, size = 0x8, scoped, tag = 'scoped memory for tpu_custom_call.1']
    #allocation5 [shape = 'u8[32768]{0}', space=vmem, size = 0x8000, scoped, tag = 'input window, operand 1, single buffered']
    #allocation6 [shape = 's32[1]{0}', space=sflag, size = 0x4, scoped, tag = 'scoped memory for tpu_custom_call.1']
    #allocation7 [shape = 'u8[65536]{0}', space=vmem, size = 0x10000, scoped, tag = 'input window, operand 3, single buffered']
    #allocation8 [shape = 'u8[32768]{0}', space=vmem, size = 0x8000, scoped, tag = 'input window, operand 5, single buffered']
    #allocation9 [shape = 's32[1]{0}', space=sflag, size = 0x4, scoped, tag = 'scoped memory for tpu_custom_call.1']
    #allocation10 [shape = 'u8[8192]{0}', space=vmem, size = 0x2000, scoped, tag = 'output window, operand 0']
    %12 = vsyncpa [#allocation3], 0
    %s13 = scalar_lea.sflag [#allocation3], 1
    %14 = vsyncpa %s13, 0
    %15 = vsyncpa [#allocation6], 0
    %16 = vsyncpa [#allocation9], 0
    %17 = vsyncpa [#allocation4], 0
    %s18 = scalar_lea.sflag [#allocation4], 1
    %19 = vsyncpa %s18, 0
    loop: start=0, step=1, limit=4
    $region2: #{tpu_custom_call.1} parent=1 // loop_pre_header
      _
    $region3: #{tpu_custom_call.1} parent=1 // loop_header
      %s21 = sphi 0, %s25
      %p22 = scmp.ge.s32.totalorder %s21, 4
      %s31 = sphi 0, %s33
      %s34 = sphi 0, %s31
      %s35 = sphi 0, %s34
      %s51 = sphi 0, %s35
      %s55 = sphi 0, %s55
      %s57 = sphi 0, %s55
      %s58 = sphi 0, %s57
      %s72 = sphi 0, %s58
      %s76 = sphi 0, %s76
      %s78 = sphi 0, %s76
      %s79 = sphi 0, %s78
      %s93 = sphi 0, %s79
      %s97 = sphi 0, %s97
      %s99 = sphi 0, %s97
      %s100 = sphi 0, %s99
      %s114 = sphi 0, %s100
      %s118 = sphi 0, %s118
      %s120 = sphi 0, %s118
      %s121 = sphi 0, %s120
      %s135 = sphi 0, %s121
      %s139 = sphi 0, %s139
      %s141 = sphi 0, %s139
      %s142 = sphi 0, %s141
      %s156 = sphi 0, %s142
      %s160 = sphi 0, %s160
      %s162 = sphi 0, %s160
      %s163 = sphi 0, %s162
      %s177 = sphi 0, %s163
      %s183 = sphi 0, %s185
      %s186 = sphi 0, %s183
      %s187 = sphi 0, %s186
      %s203 = sphi 0, %s187
    $region4: #{tpu_custom_call.1} parent=1 // loop_header_branch
      %24 = sbr.rel (%p22) target = $region8
    $region5: #{tpu_custom_call.1} parent=1 // loop_body
      %s26 = ssub.s32 %s21, 1
      %s27 = ssub.s32 %s21, 2
      %s28 = sadd.s32 %s21, 1
      %s29 = ssub.s32 %s21, %s28
      %p30 = scmp.eq.s32.totalorder %s29, 0
      %s32 = sadd.s32 %s31, 1
      %s33 = scalar_select %p30, %s31, %s32
      %p36 = pneg %p30
      %p37 = scmp.eq.s32.totalorder %s21, 1
      %p38 = por %p36, %p37
      %p39 = scmp.ne.s32.totalorder %s31, %s34
      %p40 = scmp.eq.s32.totalorder %s21, 0
      %p41 = por %p39, %p40
      %p42 = scmp.ne.s32.totalorder %s31, %s34
      %p43 = scmp.eq.s32.totalorder %s26, 1
      %p44 = por %p42, %p43
      %p45 = scmp.ne.s32.totalorder %s34, %s35
      %p46 = scmp.eq.s32.totalorder %s26, 0
      %p47 = por %p45, %p46
      %p48 = scmp.ne.s32.totalorder %s34, %s35
      %p49 = scmp.eq.s32.totalorder %s27, 1
      %p50 = por %p48, %p49
      %p52 = scmp.ne.s32.totalorder %s35, %s51
      %p53 = scmp.eq.s32.totalorder %s27, 0
      %p54 = por %p52, %p53
      %s56 = sadd.s32 %s55, 1
      %p59 = scmp.eq.s32.totalorder %s21, 1
      %p60 = scmp.ne.s32.totalorder %s55, %s57
      %p61 = scmp.eq.s32.totalorder %s21, 0
      %p62 = por %p60, %p61
      %p63 = scmp.ne.s32.totalorder %s55, %s57
      %p64 = scmp.eq.s32.totalorder %s26, 1
      %p65 = por %p63, %p64
      %p66 = scmp.ne.s32.totalorder %s57, %s58
      %p67 = scmp.eq.s32.totalorder %s26, 0
      %p68 = por %p66, %p67
      %p69 = scmp.ne.s32.totalorder %s57, %s58
      %p70 = scmp.eq.s32.totalorder %s27, 1
      %p71 = por %p69, %p70
      %p73 = scmp.ne.s32.totalorder %s58, %s72
      %p74 = scmp.eq.s32.totalorder %s27, 0
      %p75 = por %p73, %p74
      %s77 = sadd.s32 %s76, 1
      %p80 = scmp.eq.s32.totalorder %s21, 1
      %p81 = scmp.ne.s32.totalorder %s76, %s78
      %p82 = scmp.eq.s32.totalorder %s21, 0
      %p83 = por %p81, %p82
      %p84 = scmp.ne.s32.totalorder %s76, %s78
      %p85 = scmp.eq.s32.totalorder %s26, 1
      %p86 = por %p84, %p85
      %p87 = scmp.ne.s32.totalorder %s78, %s79
      %p88 = scmp.eq.s32.totalorder %s26, 0
      %p89 = por %p87, %p88
      %p90 = scmp.ne.s32.totalorder %s78, %s79
      %p91 = scmp.eq.s32.totalorder %s27, 1
      %p92 = por %p90, %p91
      %p94 = scmp.ne.s32.totalorder %s79, %s93
      %p95 = scmp.eq.s32.totalorder %s27, 0
      %p96 = por %p94, %p95
      %s98 = sadd.s32 %s97, 1
      %p101 = scmp.eq.s32.totalorder %s21, 1
      %p102 = scmp.ne.s32.totalorder %s97, %s99
      %p103 = scmp.eq.s32.totalorder %s21, 0
      %p104 = por %p102, %p103
      %p105 = scmp.ne.s32.totalorder %s97, %s99
      %p106 = scmp.eq.s32.totalorder %s26, 1
      %p107 = por %p105, %p106
      %p108 = scmp.ne.s32.totalorder %s99, %s100
      %p109 = scmp.eq.s32.totalorder %s26, 0
      %p110 = por %p108, %p109
      %p111 = scmp.ne.s32.totalorder %s99, %s100
      %p112 = scmp.eq.s32.totalorder %s27, 1
      %p113 = por %p111, %p112
      %p115 = scmp.ne.s32.totalorder %s100, %s114
      %p116 = scmp.eq.s32.totalorder %s27, 0
      %p117 = por %p115, %p116
      %s119 = sadd.s32 %s118, 1
      %p122 = scmp.eq.s32.totalorder %s21, 1
      %p123 = scmp.ne.s32.totalorder %s118, %s120
      %p124 = scmp.eq.s32.totalorder %s21, 0
      %p125 = por %p123, %p124
      %p126 = scmp.ne.s32.totalorder %s118, %s120
      %p127 = scmp.eq.s32.totalorder %s26, 1
      %p128 = por %p126, %p127
      %p129 = scmp.ne.s32.totalorder %s120, %s121
      %p130 = scmp.eq.s32.totalorder %s26, 0
      %p131 = por %p129, %p130
      %p132 = scmp.ne.s32.totalorder %s120, %s121
      %p133 = scmp.eq.s32.totalorder %s27, 1
      %p134 = por %p132, %p133
      %p136 = scmp.ne.s32.totalorder %s121, %s135
      %p137 = scmp.eq.s32.totalorder %s27, 0
      %p138 = por %p136, %p137
      %s140 = sadd.s32 %s139, 1
      %p143 = scmp.eq.s32.totalorder %s21, 1
      %p144 = scmp.ne.s32.totalorder %s139, %s141
      %p145 = scmp.eq.s32.totalorder %s21, 0
      %p146 = por %p144, %p145
      %p147 = scmp.ne.s32.totalorder %s139, %s141
      %p148 = scmp.eq.s32.totalorder %s26, 1
      %p149 = por %p147, %p148
      %p150 = scmp.ne.s32.totalorder %s141, %s142
      %p151 = scmp.eq.s32.totalorder %s26, 0
      %p152 = por %p150, %p151
      %p153 = scmp.ne.s32.totalorder %s141, %s142
      %p154 = scmp.eq.s32.totalorder %s27, 1
      %p155 = por %p153, %p154
      %p157 = scmp.ne.s32.totalorder %s142, %s156
      %p158 = scmp.eq.s32.totalorder %s27, 0
      %p159 = por %p157, %p158
      %s161 = sadd.s32 %s160, 1
      %p164 = scmp.eq.s32.totalorder %s21, 1
      %p165 = scmp.ne.s32.totalorder %s160, %s162
      %p166 = scmp.eq.s32.totalorder %s21, 0
      %p167 = por %p165, %p166
      %p168 = scmp.ne.s32.totalorder %s160, %s162
      %p169 = scmp.eq.s32.totalorder %s26, 1
      %p170 = por %p168, %p169
      %p171 = scmp.ne.s32.totalorder %s162, %s163
      %p172 = scmp.eq.s32.totalorder %s26, 0
      %p173 = por %p171, %p172
      %p174 = scmp.ne.s32.totalorder %s162, %s163
      %p175 = scmp.eq.s32.totalorder %s27, 1
      %p176 = por %p174, %p175
      %p178 = scmp.ne.s32.totalorder %s163, %s177
      %p179 = scmp.eq.s32.totalorder %s27, 0
      %p180 = por %p178, %p179
      %s181 = ssub.s32 %s21, %s28
      %p182 = scmp.eq.s32.totalorder %s181, 0
      %s184 = sadd.s32 %s183, 1
      %s185 = scalar_select %p182, %s183, %s184
      %p188 = pneg %p182
      %p189 = scmp.eq.s32.totalorder %s21, 1
      %p190 = por %p188, %p189
      %p191 = scmp.ne.s32.totalorder %s183, %s186
      %p192 = scmp.eq.s32.totalorder %s21, 0
      %p193 = por %p191, %p192
      %p194 = scmp.ne.s32.totalorder %s183, %s186
      %p195 = scmp.eq.s32.totalorder %s26, 1
      %p196 = por %p194, %p195
      %p197 = scmp.ne.s32.totalorder %s186, %s187
      %p198 = scmp.eq.s32.totalorder %s26, 0
      %p199 = por %p197, %p198
      %p200 = scmp.ne.s32.totalorder %s186, %s187
      %p201 = scmp.eq.s32.totalorder %s27, 1
      %p202 = por %p200, %p201
      %p204 = scmp.ne.s32.totalorder %s187, %s203
      %p205 = scmp.eq.s32.totalorder %s27, 0
      %p206 = por %p204, %p205
      %p207 = scmp.le.s32.totalorder 1, %s21
      %p208 = scmp.lt.s32.totalorder %s21, 3
      %p209 = pnand %p207, %p208
      %p210 = pneg %p209
      // Predicated region
      $region9: #{tpu_custom_call.1} parent=5 // pred_check
        _
      $region10: #{tpu_custom_call.1} parent=5 // pred_check_branch
        %212 = sbr.rel (%p209) target = $region12
      $region11: #{tpu_custom_call.1} parent=5 // pred_region
        %s213 = ssub.s32 %s21, 1
        // Predicated region
        $region13: #{tpu_custom_call.1} parent=11 // pred_check
          %p214 = pneg %p68
        $region14: #{tpu_custom_call.1} parent=11 // pred_check_branch
          %216 = sbr.rel (%p214) target = $region16
        $region15: #{tpu_custom_call.1} parent=11 // pred_region
          %218 = vsyncadd [#allocation6], 0
          %s219 = sshll.u32 %s1, 4
          %s220 = int_to_ptr.hbm [resolvable:$true] %s219
          %s221 = sshll.u32 [#allocation5], 4
          %s222 = int_to_ptr.vmem [resolvable:$true] %s221
          %227 = dma.hbm_to_vmem [thread:$0]  %s220, 1024, %s222, [#allocation6], 64, 64, 4
        $region16: #{tpu_custom_call.1} parent=11 // pred_fallthru
          _
        // Predicated region
        $region17: #{tpu_custom_call.1} parent=11 // pred_check
          %p228 = pneg %p89
        $region18: #{tpu_custom_call.1} parent=11 // pred_check_branch
          %230 = sbr.rel (%p228) target = $region20
        $region19: #{tpu_custom_call.1} parent=11 // pred_region
          _
        $region20: #{tpu_custom_call.1} parent=11 // pred_fallthru
          _
        // Predicated region
        $region21: #{tpu_custom_call.1} parent=11 // pred_check
          %p231 = pneg %p110
        $region22: #{tpu_custom_call.1} parent=11 // pred_check_branch
          %233 = sbr.rel (%p231) target = $region24
        $region23: #{tpu_custom_call.1} parent=11 // pred_region
          %235 = vsyncadd [#allocation6], 0
          %s236 = sshll.u32 %s3, 4
          %s237 = int_to_ptr.hbm [resolvable:$true] %s236
          %s238 = sshll.u32 [#allocation7], 4
          %s239 = int_to_ptr.vmem [resolvable:$true] %s238
          %244 = dma.hbm_to_vmem [thread:$0]  %s237, 2048, %s239, [#allocation6], 64, 64, 4
        $region24: #{tpu_custom_call.1} parent=11 // pred_fallthru
          _
        // Predicated region
        $region25: #{tpu_custom_call.1} parent=11 // pred_check
          %p245 = pneg %p131
        $region26: #{tpu_custom_call.1} parent=11 // pred_check_branch
          %247 = sbr.rel (%p245) target = $region28
        $region27: #{tpu_custom_call.1} parent=11 // pred_region
          _
        $region28: #{tpu_custom_call.1} parent=11 // pred_fallthru
          _
        // Predicated region
        $region29: #{tpu_custom_call.1} parent=11 // pred_check
          %p248 = pneg %p152
        $region30: #{tpu_custom_call.1} parent=11 // pred_check_branch
          %250 = sbr.rel (%p248) target = $region32
        $region31: #{tpu_custom_call.1} parent=11 // pred_region
          %252 = vsyncadd [#allocation9], 0
          %s253 = sshll.u32 %s5, 4
          %s254 = int_to_ptr.hbm [resolvable:$true] %s253
          %s255 = sshll.u32 [#allocation8], 4
          %s256 = int_to_ptr.vmem [resolvable:$true] %s255
          %261 = dma.hbm_to_vmem [thread:$0]  %s254, 1024, %s256, [#allocation9], 64, 64, 4
        $region32: #{tpu_custom_call.1} parent=11 // pred_fallthru
          _
        // Predicated region
        $region33: #{tpu_custom_call.1} parent=11 // pred_check
          %p262 = pneg %p173
        $region34: #{tpu_custom_call.1} parent=11 // pred_check_branch
          %264 = sbr.rel (%p262) target = $region36
        $region35: #{tpu_custom_call.1} parent=11 // pred_region
          _
        $region36: #{tpu_custom_call.1} parent=11 // pred_fallthru
          _
      $region12: #{tpu_custom_call.1} parent=5 // pred_fallthru
        _
      %p265 = scmp.lt.s32.totalorder %s21, 2
      // Predicated region
      $region37: #{tpu_custom_call.1} parent=5 // pred_check
        %p266 = pneg %p265
      $region38: #{tpu_custom_call.1} parent=5 // pred_check_branch
        %268 = sbr.rel (%p266) target = $region40
      $region39: #{tpu_custom_call.1} parent=5 // pred_region
        // Predicated region
        $region41: #{tpu_custom_call.1} parent=39 // pred_check
          %p269 = pneg %p41
        $region42: #{tpu_custom_call.1} parent=39 // pred_check_branch
          %271 = sbr.rel (%p269) target = $region44
        $region43: #{tpu_custom_call.1} parent=39 // pred_region
          %s272 = sand.u32 %s31, 1
          %s273 = scalar_lea.sflag [#allocation3], %s272
          %s274 = sand.u32 %s31, 1
          %s275 = smul.addr %s274, 8
          %s276 = scalar_lea.vmem [#allocation2], %s275
          %278 = vsyncadd %s273, 0
          %s279 = smul.addr %s21, 8
          %s280 = scalar_lea.hbm %s0, %s279
          %s282 = sshll.u32 %s280, 4
          %s283 = int_to_ptr.hbm [resolvable:$true] %s282
          %s284 = sshll.u32 %s276, 4
          %s285 = int_to_ptr.vmem [resolvable:$true] %s284
          %287 = dma.hbm_to_vmem [thread:$0]  %s283, 128, %s285, %s273
        $region44: #{tpu_custom_call.1} parent=39 // pred_fallthru
          _
      $region40: #{tpu_custom_call.1} parent=5 // pred_fallthru
        _
      %p288 = scmp.le.s32.totalorder 1, %s21
      %p289 = scmp.lt.s32.totalorder %s21, 3
      %p290 = pnand %p288, %p289
      %p291 = pneg %p290
      // Predicated region
      $region45: #{tpu_custom_call.1} parent=5 // pred_check
        _
      $region46: #{tpu_custom_call.1} parent=5 // pred_check_branch
        %293 = sbr.rel (%p290) target = $region48
      $region47: #{tpu_custom_call.1} parent=5 // pred_region
        %s294 = ssub.s32 %s21, 1
        %s295 = sand.u32 %s34, 1
        %s296 = scalar_lea.sflag [#allocation3], %s295
        %s297 = sand.u32 %s34, 1
        %s298 = smul.addr %s297, 8
        %s299 = scalar_lea.vmem [#allocation2], %s298
        // Predicated region
        $region49: #{tpu_custom_call.1} parent=47 // pred_check
          %p300 = pneg %p47
        $region50: #{tpu_custom_call.1} parent=47 // pred_check_branch
          %302 = sbr.rel (%p300) target = $region52
        $region51: #{tpu_custom_call.1} parent=47 // pred_region
          %304 = dma.done %s296, 128
        $region52: #{tpu_custom_call.1} parent=47 // pred_fallthru
          _
        // Predicated region
        $region53: #{tpu_custom_call.1} parent=47 // pred_check
          %p305 = pneg %p68
        $region54: #{tpu_custom_call.1} parent=47 // pred_check_branch
          %307 = sbr.rel (%p305) target = $region56
        $region55: #{tpu_custom_call.1} parent=47 // pred_region
          %309 = dma.done [#allocation6], 1024
        $region56: #{tpu_custom_call.1} parent=47 // pred_fallthru
          _
        // Predicated region
        $region57: #{tpu_custom_call.1} parent=47 // pred_check
          %p310 = pneg %p110
        $region58: #{tpu_custom_call.1} parent=47 // pred_check_branch
          %312 = sbr.rel (%p310) target = $region60
        $region59: #{tpu_custom_call.1} parent=47 // pred_region
          %314 = dma.done [#allocation6], 2048
        $region60: #{tpu_custom_call.1} parent=47 // pred_fallthru
          _
        // Predicated region
        $region61: #{tpu_custom_call.1} parent=47 // pred_check
          %p315 = pneg %p152
        $region62: #{tpu_custom_call.1} parent=47 // pred_check_branch
          %317 = sbr.rel (%p315) target = $region64
        $region63: #{tpu_custom_call.1} parent=47 // pred_region
          %319 = dma.done [#allocation9], 1024
        $region64: #{tpu_custom_call.1} parent=47 // pred_fallthru
          _
        %s320 = sand.u32 %s34, 1
        %s321 = scalar_lea.sflag [#allocation3], %s320
        %s322 = sand.u32 %s34, 1
        %s323 = smul.addr %s322, 8
        %s324 = scalar_lea.vmem [#allocation2], %s323
        %p325 = pneg %p47
        %p326 = pneg %p44
        %p327 = pneg %p68
        %p328 = pneg %p65
        %p329 = pneg %p89
        %p330 = pneg %p86
        %p331 = pneg %p110
        %p332 = pneg %p107
        %p333 = pneg %p131
        %p334 = pneg %p128
        %p335 = pneg %p152
        %p336 = pneg %p149
        %p337 = pneg %p173
        %p338 = pneg %p170
        %p339 = pneg %p199
        %p340 = pneg %p196
        %s341 = sand.u32 %s186, 1
        %s342 = scalar_lea.sflag [#allocation4], %s341
        %s343 = sand.u32 %s186, 1
        %s344 = smul.addr %s343, 8
        %s345 = scalar_lea.vmem [#allocation10], %s344
        %v346 = vld [vmem:[%s299] sm:$0xff]
        %v347 = vpack.c.bf16 %v346, %v346
        %v348 = vld [vmem:[#allocation5] sm:$0xf]
        %v349 = vld [vmem:[#allocation5 + $0x4] sm:$0xf]
        %v350 = vld [vmem:[#allocation5 + $0x8] sm:$0xf]
        %v351 = vld [vmem:[#allocation5 + $0xc] sm:$0xf]
        %v352 = vld [vmem:[#allocation5 + $0x10] sm:$0xf]
        %v353 = vld [vmem:[#allocation5 + $0x14] sm:$0xf]
        %v354 = vld [vmem:[#allocation5 + $0x18] sm:$0xf]
        %v355 = vld [vmem:[#allocation5 + $0x1c] sm:$0xf]
        %v356 = vld [vmem:[#allocation5 + $0x20] sm:$0xf]
        %v357 = vld [vmem:[#allocation5 + $0x24] sm:$0xf]
        %v358 = vld [vmem:[#allocation5 + $0x28] sm:$0xf]
        %v359 = vld [vmem:[#allocation5 + $0x2c] sm:$0xf]
        %v360 = vld [vmem:[#allocation5 + $0x30] sm:$0xf]
        %v361 = vld [vmem:[#allocation5 + $0x34] sm:$0xf]
        %v362 = vld [vmem:[#allocation5 + $0x38] sm:$0xf]
        %v363 = vld [vmem:[#allocation5 + $0x3c] sm:$0xf]
        %v364 = vld [vmem:[%s2] sm:$0x1]
        %v366 = vperm.slane %v364, 0
        %v384 = vunpack.c.l.b16 %v348
        %v385 = vunpack.c.l.b16 %v349
        %v386 = vunpack.c.l.b16 %v350
        %v387 = vunpack.c.l.b16 %v351
        %v388 = vunpack.c.l.b16 %v352
        %v389 = vunpack.c.l.b16 %v353
        %v390 = vunpack.c.l.b16 %v354
        %v391 = vunpack.c.l.b16 %v355
        %v392 = vunpack.c.l.b16 %v356
        %v393 = vunpack.c.l.b16 %v357
        %v394 = vunpack.c.l.b16 %v358
        %v395 = vunpack.c.l.b16 %v359
        %v396 = vunpack.c.l.b16 %v360
        %v397 = vunpack.c.l.b16 %v361
        %v398 = vunpack.c.l.b16 %v362
        %v399 = vunpack.c.l.b16 %v363
        %v400 = vpack.c.b16 %v385, %v384
        %v401 = vpack.c.b16 %v387, %v386
        %v402 = vpack.c.b16 %v389, %v388
        %v403 = vpack.c.b16 %v391, %v390
        %v404 = vpack.c.b16 %v393, %v392
        %v405 = vpack.c.b16 %v395, %v394
        %v406 = vpack.c.b16 %v397, %v396
        %v407 = vpack.c.b16 %v399, %v398
        %416 = vmatpush.bf16.msra.mxu0 %v407
        %417 = vmatpush.bf16.msra.mxu0 %v406
        %418 = vmatpush.bf16.msra.mxu0 %v405
        %419 = vmatpush.bf16.msra.mxu0 %v404
        %420 = vmatpush.bf16.msra.mxu0 %v403
        %421 = vmatpush.bf16.msra.mxu0 %v402
        %422 = vmatpush.bf16.msra.mxu0 %v401
        %423 = vmatpush.bf16.msra.mxu0 %v400
        %424 = vmatmul.bf16.gmra.mxu0 %v347
        %v425 = vpop.f32.mrf.mxu0
        %v426 = vadd.f32 %v366, %v425
        %v427 = vpop.f32.mrf.mxu0
        %428 = vdwg.mxu0
        %v429 = vtanh.pop %v426
        %v430 = vld [vmem:[#allocation7] sm:$0xf]
        %v431 = vld [vmem:[#allocation7 + $0x4] sm:$0xf]
        %v432 = vld [vmem:[#allocation7 + $0x8] sm:$0xf]
        %v433 = vld [vmem:[#allocation7 + $0xc] sm:$0xf]
        %v434 = vld [vmem:[#allocation7 + $0x10] sm:$0xf]
        %v435 = vld [vmem:[#allocation7 + $0x14] sm:$0xf]
        %v436 = vld [vmem:[#allocation7 + $0x18] sm:$0xf]
        %v437 = vld [vmem:[#allocation7 + $0x1c] sm:$0xf]
        %v438 = vld [vmem:[#allocation7 + $0x20] sm:$0xf]
        %v439 = vld [vmem:[#allocation7 + $0x24] sm:$0xf]
        %v440 = vld [vmem:[#allocation7 + $0x28] sm:$0xf]
        %v441 = vld [vmem:[#allocation7 + $0x2c] sm:$0xf]
        %v442 = vld [vmem:[#allocation7 + $0x30] sm:$0xf]
        %v443 = vld [vmem:[#allocation7 + $0x34] sm:$0xf]
        %v444 = vld [vmem:[#allocation7 + $0x38] sm:$0xf]
        %v445 = vld [vmem:[#allocation7 + $0x3c] sm:$0xf]
        %v446 = vld [vmem:[%s4] sm:$0x1]
        %v447 = vpack.c.bf16 %v429, %v429
        %v449 = vperm.slane %v446, 0
        %v467 = vunpack.c.l.b16 %v430
        %v468 = vunpack.c.l.b16 %v431
        %v469 = vunpack.c.l.b16 %v432
        %v470 = vunpack.c.l.b16 %v433
        %v471 = vunpack.c.l.b16 %v434
        %v472 = vunpack.c.l.b16 %v435
        %v473 = vunpack.c.l.b16 %v436
        %v474 = vunpack.c.l.b16 %v437
        %v475 = vunpack.c.l.b16 %v438
        %v476 = vunpack.c.l.b16 %v439
        %v477 = vunpack.c.l.b16 %v440
        %v478 = vunpack.c.l.b16 %v441
        %v479 = vunpack.c.l.b16 %v442
        %v480 = vunpack.c.l.b16 %v443
        %v481 = vunpack.c.l.b16 %v444
        %v482 = vunpack.c.l.b16 %v445
        %v483 = vpack.c.b16 %v468, %v467
        %v484 = vpack.c.b16 %v470, %v469
        %v485 = vpack.c.b16 %v472, %v471
        %v486 = vpack.c.b16 %v474, %v473
        %v487 = vpack.c.b16 %v476, %v475
        %v488 = vpack.c.b16 %v478, %v477
        %v489 = vpack.c.b16 %v480, %v479
        %v490 = vpack.c.b16 %v482, %v481
        %499 = vmatpush.bf16.msra.mxu0 %v490
        %500 = vmatpush.bf16.msra.mxu0 %v489
        %501 = vmatpush.bf16.msra.mxu0 %v488
        %502 = vmatpush.bf16.msra.mxu0 %v487
        %503 = vmatpush.bf16.msra.mxu0 %v486
        %504 = vmatpush.bf16.msra.mxu0 %v485
        %505 = vmatpush.bf16.msra.mxu0 %v484
        %506 = vmatpush.bf16.msra.mxu0 %v483
        %507 = vmatmul.bf16.gmra.mxu0 %v447
        %v508 = vpop.f32.mrf.mxu0
        %v509 = vadd.f32 %v449, %v508
        %v510 = vpop.f32.mrf.mxu0
        %511 = vdwg.mxu0
        %v512 = vtanh.pop %v509
        %s513 = scalar_lea.vmem [#allocation7], 64
        %v514 = vld [vmem:[%s513] sm:$0xf]
        %v515 = vld [vmem:[%s513 + $0x4] sm:$0xf]
        %v516 = vld [vmem:[%s513 + $0x8] sm:$0xf]
        %v517 = vld [vmem:[%s513 + $0xc] sm:$0xf]
        %v518 = vld [vmem:[%s513 + $0x10] sm:$0xf]
        %v519 = vld [vmem:[%s513 + $0x14] sm:$0xf]
        %v520 = vld [vmem:[%s513 + $0x18] sm:$0xf]
        %v521 = vld [vmem:[%s513 + $0x1c] sm:$0xf]
        %v522 = vld [vmem:[%s513 + $0x20] sm:$0xf]
        %v523 = vld [vmem:[%s513 + $0x24] sm:$0xf]
        %v524 = vld [vmem:[%s513 + $0x28] sm:$0xf]
        %v525 = vld [vmem:[%s513 + $0x2c] sm:$0xf]
        %v526 = vld [vmem:[%s513 + $0x30] sm:$0xf]
        %v527 = vld [vmem:[%s513 + $0x34] sm:$0xf]
        %v528 = vld [vmem:[%s513 + $0x38] sm:$0xf]
        %v529 = vld [vmem:[%s513 + $0x3c] sm:$0xf]
        %s530 = scalar_lea.vmem %s4, 1
        %v531 = vld [vmem:[%s530] sm:$0x1]
        %v532 = vpack.c.bf16 %v512, %v512
        %v534 = vperm.slane %v531, 0
        %v552 = vunpack.c.l.b16 %v514
        %v553 = vunpack.c.l.b16 %v515
        %v554 = vunpack.c.l.b16 %v516
        %v555 = vunpack.c.l.b16 %v517
        %v556 = vunpack.c.l.b16 %v518
        %v557 = vunpack.c.l.b16 %v519
        %v558 = vunpack.c.l.b16 %v520
        %v559 = vunpack.c.l.b16 %v521
        %v560 = vunpack.c.l.b16 %v522
        %v561 = vunpack.c.l.b16 %v523
        %v562 = vunpack.c.l.b16 %v524
        %v563 = vunpack.c.l.b16 %v525
        %v564 = vunpack.c.l.b16 %v526
        %v565 = vunpack.c.l.b16 %v527
        %v566 = vunpack.c.l.b16 %v528
        %v567 = vunpack.c.l.b16 %v529
        %v568 = vpack.c.b16 %v553, %v552
        %v569 = vpack.c.b16 %v555, %v554
        %v570 = vpack.c.b16 %v557, %v556
        %v571 = vpack.c.b16 %v559, %v558
        %v572 = vpack.c.b16 %v561, %v560
        %v573 = vpack.c.b16 %v563, %v562
        %v574 = vpack.c.b16 %v565, %v564
        %v575 = vpack.c.b16 %v567, %v566
        %584 = vmatpush.bf16.msra.mxu0 %v575
        %585 = vmatpush.bf16.msra.mxu0 %v574
        %586 = vmatpush.bf16.msra.mxu0 %v573
        %587 = vmatpush.bf16.msra.mxu0 %v572
        %588 = vmatpush.bf16.msra.mxu0 %v571
        %589 = vmatpush.bf16.msra.mxu0 %v570
        %590 = vmatpush.bf16.msra.mxu0 %v569
        %591 = vmatpush.bf16.msra.mxu0 %v568
        %592 = vmatmul.bf16.gmra.mxu0 %v532
        %v593 = vpop.f32.mrf.mxu0
        %v594 = vadd.f32 %v534, %v593
        %v595 = vpop.f32.mrf.mxu0
        %596 = vdwg.mxu0
        %v597 = vtanh.pop %v594
        %v598 = vpack.c.bf16 %v597, %v597
        %v599 = vld [vmem:[#allocation8] sm:$0xf]
        %v600 = vld [vmem:[#allocation8 + $0x4] sm:$0xf]
        %v601 = vld [vmem:[#allocation8 + $0x8] sm:$0xf]
        %v602 = vld [vmem:[#allocation8 + $0xc] sm:$0xf]
        %v603 = vld [vmem:[#allocation8 + $0x10] sm:$0xf]
        %v604 = vld [vmem:[#allocation8 + $0x14] sm:$0xf]
        %v605 = vld [vmem:[#allocation8 + $0x18] sm:$0xf]
        %v606 = vld [vmem:[#allocation8 + $0x1c] sm:$0xf]
        %v607 = vld [vmem:[#allocation8 + $0x20] sm:$0xf]
        %v608 = vld [vmem:[#allocation8 + $0x24] sm:$0xf]
        %v609 = vld [vmem:[#allocation8 + $0x28] sm:$0xf]
        %v610 = vld [vmem:[#allocation8 + $0x2c] sm:$0xf]
        %v611 = vld [vmem:[#allocation8 + $0x30] sm:$0xf]
        %v612 = vld [vmem:[#allocation8 + $0x34] sm:$0xf]
        %v613 = vld [vmem:[#allocation8 + $0x38] sm:$0xf]
        %v614 = vld [vmem:[#allocation8 + $0x3c] sm:$0xf]
        %v615 = vld [vmem:[%s6] sm:$0x1]
        %v617 = vperm.slane %v615, 0
        %v635 = vunpack.c.l.b16 %v599
        %v636 = vunpack.c.l.b16 %v600
        %v637 = vunpack.c.l.b16 %v601
        %v638 = vunpack.c.l.b16 %v602
        %v639 = vunpack.c.l.b16 %v603
        %v640 = vunpack.c.l.b16 %v604
        %v641 = vunpack.c.l.b16 %v605
        %v642 = vunpack.c.l.b16 %v606
        %v643 = vunpack.c.l.b16 %v607
        %v644 = vunpack.c.l.b16 %v608
        %v645 = vunpack.c.l.b16 %v609
        %v646 = vunpack.c.l.b16 %v610
        %v647 = vunpack.c.l.b16 %v611
        %v648 = vunpack.c.l.b16 %v612
        %v649 = vunpack.c.l.b16 %v613
        %v650 = vunpack.c.l.b16 %v614
        %v651 = vpack.c.b16 %v636, %v635
        %v652 = vpack.c.b16 %v638, %v637
        %v653 = vpack.c.b16 %v640, %v639
        %v654 = vpack.c.b16 %v642, %v641
        %v655 = vpack.c.b16 %v644, %v643
        %v656 = vpack.c.b16 %v646, %v645
        %v657 = vpack.c.b16 %v648, %v647
        %v658 = vpack.c.b16 %v650, %v649
        %667 = vmatpush.bf16.msra.mxu0 %v658
        %668 = vmatpush.bf16.msra.mxu0 %v657
        %669 = vmatpush.bf16.msra.mxu0 %v656
        %670 = vmatpush.bf16.msra.mxu0 %v655
        %671 = vmatpush.bf16.msra.mxu0 %v654
        %672 = vmatpush.bf16.msra.mxu0 %v653
        %673 = vmatpush.bf16.msra.mxu0 %v652
        %674 = vmatpush.bf16.msra.mxu0 %v651
        %675 = vmatmul.bf16.gmra.mxu0 %v598
        %v676 = vpop.f32.mrf.mxu0
        %v677 = vadd.f32 %v617, %v676
        %v678 = vpop.f32.mrf.mxu0
        %679 = vdwg.mxu0
        %680 = vst [vmem:[%s345] sm:$0xff] %v677
        %s681 = sand.u32 %s186, 1
        %s682 = scalar_lea.sflag [#allocation4], %s681
        %s683 = sand.u32 %s186, 1
        %s684 = smul.addr %s683, 8
        %s685 = scalar_lea.vmem [#allocation10], %s684
        // Predicated region
        $region65: #{tpu_custom_call.1} parent=47 // pred_check
          %p686 = pneg %p196
        $region66: #{tpu_custom_call.1} parent=47 // pred_check_branch
          %688 = sbr.rel (%p686) target = $region68
        $region67: #{tpu_custom_call.1} parent=47 // pred_region
          %690 = vsyncadd %s682, 0
          %s691 = smul.addr %s26, 8
          %s692 = scalar_lea.hbm %s7, %s691
          %s694 = sshll.u32 %s685, 4
          %s695 = int_to_ptr.vmem [resolvable:$true] %s694
          %s696 = sshll.u32 %s692, 4
          %s697 = int_to_ptr.hbm [resolvable:$true] %s696
          %699 = dma.vmem_to_hbm [thread:$0]  %s695, 128, %s697, %s682
        $region68: #{tpu_custom_call.1} parent=47 // pred_fallthru
          _
      $region48: #{tpu_custom_call.1} parent=5 // pred_fallthru
        _
      %p700 = scmp.le.s32.totalorder 2, %s21
      // Predicated region
      $region69: #{tpu_custom_call.1} parent=5 // pred_check
        %p701 = pneg %p700
      $region70: #{tpu_custom_call.1} parent=5 // pred_check_branch
        %703 = sbr.rel (%p701) target = $region72
      $region71: #{tpu_custom_call.1} parent=5 // pred_region
        %s704 = ssub.s32 %s21, 2
        // Predicated region
        $region73: #{tpu_custom_call.1} parent=71 // pred_check
          %p705 = pneg %p202
        $region74: #{tpu_custom_call.1} parent=71 // pred_check_branch
          %707 = sbr.rel (%p705) target = $region76
        $region75: #{tpu_custom_call.1} parent=71 // pred_region
          %s708 = sand.u32 %s187, 1
          %s709 = scalar_lea.sflag [#allocation4], %s708
          %s710 = sand.u32 %s187, 1
          %s711 = smul.addr %s710, 8
          %s712 = scalar_lea.vmem [#allocation10], %s711
          %714 = dma.done %s709, 128
        $region76: #{tpu_custom_call.1} parent=71 // pred_fallthru
          _
      $region72: #{tpu_custom_call.1} parent=5 // pred_fallthru
        _
    $region6: #{tpu_custom_call.1} parent=1 // loop_footer
      %s25 = sadd.s32 1, %s21
    $region7: #{tpu_custom_call.1} parent=1 // loop_footer_branch
      %20 = sbr.rel target = $region3
    $region8: #{tpu_custom_call.1} parent=1 // loop_exit
      _
    %715 = vsyncpa [#allocation3], 1
    %s716 = scalar_lea.sflag [#allocation3], 1
    %717 = vsyncpa %s716, 1
    %718 = vsyncpa [#allocation6], 1
    %719 = vsyncpa [#allocation9], 1
    %720 = vsyncpa [#allocation4], 1
    %s721 = scalar_lea.sflag [#allocation4], 1
    %722 = vsyncpa %s721, 1

// kernel: tpu_custom_call.1
$region0: #{tpu_custom_call.1}
  #allocation0 [shape = 'u32[]', space=smem, size = 0x4, offset = 0x4, fixed_abs, tag = 'smem constant byte address 0x4 - core index']
  #allocation1 [shape = 'u32[72,128]{1,0:T(1,128)}', space=vmem, size = 0x9000, scoped, tag = 'internal scratch']
  %s0 = inlined_call_operand.hbm [shape: f32[16,128], index: 0, kind: input, shape index: {}]
  %s1 = inlined_call_operand.hbm [shape: bf16[128,128], index: 1, kind: input, shape index: {}]
  %s2 = inlined_call_operand.vmem [shape: f32[1,128], index: 2, kind: input, shape index: {}]
  %s3 = inlined_call_operand.hbm [shape: bf16[2,128,128], index: 3, kind: input, shape index: {}]
  %s4 = inlined_call_operand.vmem [shape: f32[2,1,128], index: 4, kind: input, shape index: {}]
  %s5 = inlined_call_operand.hbm [shape: bf16[128,128], index: 5, kind: input, shape index: {}]
  %s6 = inlined_call_operand.vmem [shape: f32[1,128], index: 6, kind: input, shape index: {}]
  %s7 = inlined_call_operand.hbm [shape: f32[16,128], index: 7, kind: output, shape index: {}]
  %s8 = sld [smem:[#allocation0]]
  $region77: #{tpu_custom_call.1} parent=0
    _
  %s10 = ssub.s32 1, %s8
  %s11 = scalar_select 0, %s10, %s8
  $region1: #{tpu_custom_call.1} parent=0
    #allocation2 [shape = 'u8[8192]{0}', space=vmem, size = 0x2000, scoped, tag = 'input window, operand 0']
    #allocation3 [shape = 's32[2]{0}', space=sflag, size = 0x8, scoped, tag = 'scoped memory for tpu_custom_call.1']
    #allocation4 [shape = 's32[2]{0}', space=sflag, size = 0x8, scoped, tag = 'scoped memory for tpu_custom_call.1']
    #allocation5 [shape = 'u8[32768]{0}', space=vmem, size = 0x8000, scoped, tag = 'input window, operand 1, single buffered']
    #allocation6 [shape = 's32[1]{0}', space=sflag, size = 0x4, scoped, tag = 'scoped memory for tpu_custom_call.1']
    #allocation7 [shape = 'u8[65536]{0}', space=vmem, size = 0x10000, scoped, tag = 'input window, operand 3, single buffered']
    #allocation8 [shape = 'u8[32768]{0}', space=vmem, size = 0x8000, scoped, tag = 'input window, operand 5, single buffered']
    #allocation9 [shape = 's32[1]{0}', space=sflag, size = 0x4, scoped, tag = 'scoped memory for tpu_custom_call.1']
    #allocation10 [shape = 'u8[8192]{0}', space=vmem, size = 0x2000, scoped, tag = 'output window, operand 0']
    %12 = vsyncpa [#allocation3], 0
    %s13 = scalar_lea.sflag [#allocation3], 1
    %14 = vsyncpa %s13, 0
    %15 = vsyncpa [#allocation6], 0
    %16 = vsyncpa [#allocation9], 0
    %17 = vsyncpa [#allocation4], 0
    %s18 = scalar_lea.sflag [#allocation4], 1
    %19 = vsyncpa %s18, 0
    loop: start=0, step=1, limit=4
    $region2: #{tpu_custom_call.1} parent=1 // loop_pre_header
      _
    $region3: #{tpu_custom_call.1} parent=1 // loop_header
      %s21 = sphi 0, %s25
      %p22 = scmp.ge.s32.totalorder %s21, 4
      %s31 = sphi 0, %s33
      %s34 = sphi 0, %s31
      %s35 = sphi 0, %s34
      %s51 = sphi 0, %s35
      %s55 = sphi 0, %s55
      %s57 = sphi 0, %s55
      %s58 = sphi 0, %s57
      %s72 = sphi 0, %s58
      %s76 = sphi 0, %s76
      %s78 = sphi 0, %s76
      %s79 = sphi 0, %s78
      %s93 = sphi 0, %s79
      %s97 = sphi 0, %s97
      %s99 = sphi 0, %s97
      %s100 = sphi 0, %s99
      %s114 = sphi 0, %s100
      %s118 = sphi 0, %s118
      %s120 = sphi 0, %s118
      %s121 = sphi 0, %s120
      %s135 = sphi 0, %s121
      %s139 = sphi 0, %s139
      %s141 = sphi 0, %s139
      %s142 = sphi 0, %s141
      %s156 = sphi 0, %s142
      %s160 = sphi 0, %s160
      %s162 = sphi 0, %s160
      %s163 = sphi 0, %s162
      %s177 = sphi 0, %s163
      %s183 = sphi 0, %s185
      %s186 = sphi 0, %s183
      %s187 = sphi 0, %s186
      %s203 = sphi 0, %s187
    $region4: #{tpu_custom_call.1} parent=1 // loop_header_branch
      %24 = sbr.rel (%p22) target = $region8
    $region5: #{tpu_custom_call.1} parent=1 // loop_body
      %s26 = ssub.s32 %s21, 1
      %s27 = ssub.s32 %s21, 2
      %s28 = sadd.s32 %s21, 1
      %s29 = ssub.s32 %s21, %s28
      %p30 = scmp.eq.s32.totalorder %s29, 0
      %s32 = sadd.s32 %s31, 1
      %s33 = scalar_select %p30, %s31, %s32
      %p36 = pneg %p30
      %p37 = scmp.eq.s32.totalorder %s21, 1
      %p38 = por %p36, %p37
      %p39 = scmp.ne.s32.totalorder %s31, %s34
      %p40 = scmp.eq.s32.totalorder %s21, 0
      %p41 = por %p39, %p40
      %p42 = scmp.ne.s32.totalorder %s31, %s34
      %p43 = scmp.eq.s32.totalorder %s26, 1
      %p44 = por %p42, %p43
      %p45 = scmp.ne.s32.totalorder %s34, %s35
      %p46 = scmp.eq.s32.totalorder %s26, 0
      %p47 = por %p45, %p46
      %p48 = scmp.ne.s32.totalorder %s34, %s35
      %p49 = scmp.eq.s32.totalorder %s27, 1
      %p50 = por %p48, %p49
      %p52 = scmp.ne.s32.totalorder %s35, %s51
      %p53 = scmp.eq.s32.totalorder %s27, 0
      %p54 = por %p52, %p53
      %s56 = sadd.s32 %s55, 1
      %p59 = scmp.eq.s32.totalorder %s21, 1
      %p60 = scmp.ne.s32.totalorder %s55, %s57
      %p61 = scmp.eq.s32.totalorder %s21, 0
      %p62 = por %p60, %p61
      %p63 = scmp.ne.s32.totalorder %s55, %s57
      %p64 = scmp.eq.s32.totalorder %s26, 1
      %p65 = por %p63, %p64
      %p66 = scmp.ne.s32.totalorder %s57, %s58
      %p67 = scmp.eq.s32.totalorder %s26, 0
      %p68 = por %p66, %p67
      %p69 = scmp.ne.s32.totalorder %s57, %s58
      %p70 = scmp.eq.s32.totalorder %s27, 1
      %p71 = por %p69, %p70
      %p73 = scmp.ne.s32.totalorder %s58, %s72
      %p74 = scmp.eq.s32.totalorder %s27, 0
      %p75 = por %p73, %p74
      %s77 = sadd.s32 %s76, 1
      %p80 = scmp.eq.s32.totalorder %s21, 1
      %p81 = scmp.ne.s32.totalorder %s76, %s78
      %p82 = scmp.eq.s32.totalorder %s21, 0
      %p83 = por %p81, %p82
      %p84 = scmp.ne.s32.totalorder %s76, %s78
      %p85 = scmp.eq.s32.totalorder %s26, 1
      %p86 = por %p84, %p85
      %p87 = scmp.ne.s32.totalorder %s78, %s79
      %p88 = scmp.eq.s32.totalorder %s26, 0
      %p89 = por %p87, %p88
      %p90 = scmp.ne.s32.totalorder %s78, %s79
      %p91 = scmp.eq.s32.totalorder %s27, 1
      %p92 = por %p90, %p91
      %p94 = scmp.ne.s32.totalorder %s79, %s93
      %p95 = scmp.eq.s32.totalorder %s27, 0
      %p96 = por %p94, %p95
      %s98 = sadd.s32 %s97, 1
      %p101 = scmp.eq.s32.totalorder %s21, 1
      %p102 = scmp.ne.s32.totalorder %s97, %s99
      %p103 = scmp.eq.s32.totalorder %s21, 0
      %p104 = por %p102, %p103
      %p105 = scmp.ne.s32.totalorder %s97, %s99
      %p106 = scmp.eq.s32.totalorder %s26, 1
      %p107 = por %p105, %p106
      %p108 = scmp.ne.s32.totalorder %s99, %s100
      %p109 = scmp.eq.s32.totalorder %s26, 0
      %p110 = por %p108, %p109
      %p111 = scmp.ne.s32.totalorder %s99, %s100
      %p112 = scmp.eq.s32.totalorder %s27, 1
      %p113 = por %p111, %p112
      %p115 = scmp.ne.s32.totalorder %s100, %s114
      %p116 = scmp.eq.s32.totalorder %s27, 0
      %p117 = por %p115, %p116
      %s119 = sadd.s32 %s118, 1
      %p122 = scmp.eq.s32.totalorder %s21, 1
      %p123 = scmp.ne.s32.totalorder %s118, %s120
      %p124 = scmp.eq.s32.totalorder %s21, 0
      %p125 = por %p123, %p124
      %p126 = scmp.ne.s32.totalorder %s118, %s120
      %p127 = scmp.eq.s32.totalorder %s26, 1
      %p128 = por %p126, %p127
      %p129 = scmp.ne.s32.totalorder %s120, %s121
      %p130 = scmp.eq.s32.totalorder %s26, 0
      %p131 = por %p129, %p130
      %p132 = scmp.ne.s32.totalorder %s120, %s121
      %p133 = scmp.eq.s32.totalorder %s27, 1
      %p134 = por %p132, %p133
      %p136 = scmp.ne.s32.totalorder %s121, %s135
      %p137 = scmp.eq.s32.totalorder %s27, 0
      %p138 = por %p136, %p137
      %s140 = sadd.s32 %s139, 1
      %p143 = scmp.eq.s32.totalorder %s21, 1
      %p144 = scmp.ne.s32.totalorder %s139, %s141
      %p145 = scmp.eq.s32.totalorder %s21, 0
      %p146 = por %p144, %p145
      %p147 = scmp.ne.s32.totalorder %s139, %s141
      %p148 = scmp.eq.s32.totalorder %s26, 1
      %p149 = por %p147, %p148
      %p150 = scmp.ne.s32.totalorder %s141, %s142
      %p151 = scmp.eq.s32.totalorder %s26, 0
      %p152 = por %p150, %p151
      %p153 = scmp.ne.s32.totalorder %s141, %s142
      %p154 = scmp.eq.s32.totalorder %s27, 1
      %p155 = por %p153, %p154
      %p157 = scmp.ne.s32.totalorder %s142, %s156
      %p158 = scmp.eq.s32.totalorder %s27, 0
      %p159 = por %p157, %p158
      %s161 = sadd.s32 %s160, 1
      %p164 = scmp.eq.s32.totalorder %s21, 1
      %p165 = scmp.ne.s32.totalorder %s160, %s162
      %p166 = scmp.eq.s32.totalorder %s21, 0
      %p167 = por %p165, %p166
      %p168 = scmp.ne.s32.totalorder %s160, %s162
      %p169 = scmp.eq.s32.totalorder %s26, 1
      %p170 = por %p168, %p169
      %p171 = scmp.ne.s32.totalorder %s162, %s163
      %p172 = scmp.eq.s32.totalorder %s26, 0
      %p173 = por %p171, %p172
      %p174 = scmp.ne.s32.totalorder %s162, %s163
      %p175 = scmp.eq.s32.totalorder %s27, 1
      %p176 = por %p174, %p175
      %p178 = scmp.ne.s32.totalorder %s163, %s177
      %p179 = scmp.eq.s32.totalorder %s27, 0
      %p180 = por %p178, %p179
      %s181 = ssub.s32 %s21, %s28
      %p182 = scmp.eq.s32.totalorder %s181, 0
      %s184 = sadd.s32 %s183, 1
      %s185 = scalar_select %p182, %s183, %s184
      %p188 = pneg %p182
      %p189 = scmp.eq.s32.totalorder %s21, 1
      %p190 = por %p188, %p189
      %p191 = scmp.ne.s32.totalorder %s183, %s186
      %p192 = scmp.eq.s32.totalorder %s21, 0
      %p193 = por %p191, %p192
      %p194 = scmp.ne.s32.totalorder %s183, %s186
      %p195 = scmp.eq.s32.totalorder %s26, 1
      %p196 = por %p194, %p195
      %p197 = scmp.ne.s32.totalorder %s186, %s187
      %p198 = scmp.eq.s32.totalorder %s26, 0
      %p199 = por %p197, %p198
      %p200 = scmp.ne.s32.totalorder %s186, %s187
      %p201 = scmp.eq.s32.totalorder %s27, 1
      %p202 = por %p200, %p201
      %p204 = scmp.ne.s32.totalorder %s187, %s203
      %p205 = scmp.eq.s32.totalorder %s27, 0
      %p206 = por %p204, %p205
      %p207 = scmp.le.s32.totalorder 1, %s21
      %p208 = scmp.lt.s32.totalorder %s21, 3
      %p209 = pnand %p207, %p208
      %p210 = pneg %p209
      // Predicated region
      $region9: #{tpu_custom_call.1} parent=5 // pred_check
        _
      $region10: #{tpu_custom_call.1} parent=5 // pred_check_branch
        %212 = sbr.rel (%p209) target = $region12
      $region11: #{tpu_custom_call.1} parent=5 // pred_region
        %s213 = ssub.s32 %s21, 1
        // Predicated region
        $region13: #{tpu_custom_call.1} parent=11 // pred_check
          %p214 = pneg %p68
        $region14: #{tpu_custom_call.1} parent=11 // pred_check_branch
          %216 = sbr.rel (%p214) target = $region16
        $region15: #{tpu_custom_call.1} parent=11 // pred_region
          %218 = vsyncadd [#allocation6], 0
          %s219 = sshll.u32 %s1, 4
          %s220 = int_to_ptr.hbm [resolvable:$true] %s219
          %s221 = sshll.u32 [#allocation5], 4
          %s222 = int_to_ptr.vmem [resolvable:$true] %s221
          %227 = dma.hbm_to_vmem [thread:$0]  %s220, 1024, %s222, [#allocation6], 64, 64, 4
        $region16: #{tpu_custom_call.1} parent=11 // pred_fallthru
          _
        // Predicated region
        $region17: #{tpu_custom_call.1} parent=11 // pred_check
          %p228 = pneg %p89
        $region18: #{tpu_custom_call.1} parent=11 // pred_check_branch
          %230 = sbr.rel (%p228) target = $region20
        $region19: #{tpu_custom_call.1} parent=11 // pred_region
          _
        $region20: #{tpu_custom_call.1} parent=11 // pred_fallthru
          _
        // Predicated region
        $region21: #{tpu_custom_call.1} parent=11 // pred_check
          %p231 = pneg %p110
        $region22: #{tpu_custom_call.1} parent=11 // pred_check_branch
          %233 = sbr.rel (%p231) target = $region24
        $region23: #{tpu_custom_call.1} parent=11 // pred_region
          %235 = vsyncadd [#allocation6], 0
          %s236 = sshll.u32 %s3, 4
          %s237 = int_to_ptr.hbm [resolvable:$true] %s236
          %s238 = sshll.u32 [#allocation7], 4
          %s239 = int_to_ptr.vmem [resolvable:$true] %s238
          %244 = dma.hbm_to_vmem [thread:$0]  %s237, 2048, %s239, [#allocation6], 64, 64, 4
        $region24: #{tpu_custom_call.1} parent=11 // pred_fallthru
          _
        // Predicated region
        $region25: #{tpu_custom_call.1} parent=11 // pred_check
          %p245 = pneg %p131
        $region26: #{tpu_custom_call.1} parent=11 // pred_check_branch
          %247 = sbr.rel (%p245) target = $region28
        $region27: #{tpu_custom_call.1} parent=11 // pred_region
          _
        $region28: #{tpu_custom_call.1} parent=11 // pred_fallthru
          _
        // Predicated region
        $region29: #{tpu_custom_call.1} parent=11 // pred_check
          %p248 = pneg %p152
        $region30: #{tpu_custom_call.1} parent=11 // pred_check_branch
          %250 = sbr.rel (%p248) target = $region32
        $region31: #{tpu_custom_call.1} parent=11 // pred_region
          %252 = vsyncadd [#allocation9], 0
          %s253 = sshll.u32 %s5, 4
          %s254 = int_to_ptr.hbm [resolvable:$true] %s253
          %s255 = sshll.u32 [#allocation8], 4
          %s256 = int_to_ptr.vmem [resolvable:$true] %s255
          %261 = dma.hbm_to_vmem [thread:$0]  %s254, 1024, %s256, [#allocation9], 64, 64, 4
        $region32: #{tpu_custom_call.1} parent=11 // pred_fallthru
          _
        // Predicated region
        $region33: #{tpu_custom_call.1} parent=11 // pred_check
          %p262 = pneg %p173
        $region34: #{tpu_custom_call.1} parent=11 // pred_check_branch
          %264 = sbr.rel (%p262) target = $region36
        $region35: #{tpu_custom_call.1} parent=11 // pred_region
          _
        $region36: #{tpu_custom_call.1} parent=11 // pred_fallthru
          _
      $region12: #{tpu_custom_call.1} parent=5 // pred_fallthru
        _
      %p265 = scmp.lt.s32.totalorder %s21, 2
      // Predicated region
      $region37: #{tpu_custom_call.1} parent=5 // pred_check
        %p266 = pneg %p265
      $region38: #{tpu_custom_call.1} parent=5 // pred_check_branch
        %268 = sbr.rel (%p266) target = $region40
      $region39: #{tpu_custom_call.1} parent=5 // pred_region
        // Predicated region
        $region41: #{tpu_custom_call.1} parent=39 // pred_check
          %p269 = pneg %p41
        $region42: #{tpu_custom_call.1} parent=39 // pred_check_branch
          %271 = sbr.rel (%p269) target = $region44
        $region43: #{tpu_custom_call.1} parent=39 // pred_region
          %s272 = sand.u32 %s31, 1
          %s273 = scalar_lea.sflag [#allocation3], %s272
          %s274 = sand.u32 %s31, 1
          %s275 = smul.addr %s274, 8
          %s276 = scalar_lea.vmem [#allocation2], %s275
          %278 = vsyncadd %s273, 0
          %s279 = smul.addr %s21, 8
          %s280 = scalar_lea.hbm %s0, %s279
          %s282 = sshll.u32 %s280, 4
          %s283 = int_to_ptr.hbm [resolvable:$true] %s282
          %s284 = sshll.u32 %s276, 4
          %s285 = int_to_ptr.vmem [resolvable:$true] %s284
          %287 = dma.hbm_to_vmem [thread:$0]  %s283, 128, %s285, %s273
        $region44: #{tpu_custom_call.1} parent=39 // pred_fallthru
          _
      $region40: #{tpu_custom_call.1} parent=5 // pred_fallthru
        _
      %p288 = scmp.le.s32.totalorder 1, %s21
      %p289 = scmp.lt.s32.totalorder %s21, 3
      %p290 = pnand %p288, %p289
      %p291 = pneg %p290
      // Predicated region
      $region45: #{tpu_custom_call.1} parent=5 // pred_check
        _
      $region46: #{tpu_custom_call.1} parent=5 // pred_check_branch
        %293 = sbr.rel (%p290) target = $region48
      $region47: #{tpu_custom_call.1} parent=5 // pred_region
        %s294 = ssub.s32 %s21, 1
        %s295 = sand.u32 %s34, 1
        %s296 = scalar_lea.sflag [#allocation3], %s295
        %s297 = sand.u32 %s34, 1
        %s298 = smul.addr %s297, 8
        %s299 = scalar_lea.vmem [#allocation2], %s298
        // Predicated region
        $region49: #{tpu_custom_call.1} parent=47 // pred_check
          %p300 = pneg %p47
        $region50: #{tpu_custom_call.1} parent=47 // pred_check_branch
          %302 = sbr.rel (%p300) target = $region52
        $region51: #{tpu_custom_call.1} parent=47 // pred_region
          %304 = dma.done %s296, 128
        $region52: #{tpu_custom_call.1} parent=47 // pred_fallthru
          _
        // Predicated region
        $region53: #{tpu_custom_call.1} parent=47 // pred_check
          %p305 = pneg %p68
        $region54: #{tpu_custom_call.1} parent=47 // pred_check_branch
          %307 = sbr.rel (%p305) target = $region56
        $region55: #{tpu_custom_call.1} parent=47 // pred_region
          %309 = dma.done [#allocation6], 1024
        $region56: #{tpu_custom_call.1} parent=47 // pred_fallthru
          _
        // Predicated region
        $region57: #{tpu_custom_call.1} parent=47 // pred_check
          %p310 = pneg %p110
        $region58: #{tpu_custom_call.1} parent=47 // pred_check_branch
          %312 = sbr.rel (%p310) target = $region60
        $region59: #{tpu_custom_call.1} parent=47 // pred_region
          %314 = dma.done [#allocation6], 2048
        $region60: #{tpu_custom_call.1} parent=47 // pred_fallthru
          _
        // Predicated region
        $region61: #{tpu_custom_call.1} parent=47 // pred_check
          %p315 = pneg %p152
        $region62: #{tpu_custom_call.1} parent=47 // pred_check_branch
          %317 = sbr.rel (%p315) target = $region64
        $region63: #{tpu_custom_call.1} parent=47 // pred_region
          %319 = dma.done [#allocation9], 1024
        $region64: #{tpu_custom_call.1} parent=47 // pred_fallthru
          _
        %s320 = sand.u32 %s34, 1
        %s321 = scalar_lea.sflag [#allocation3], %s320
        %s322 = sand.u32 %s34, 1
        %s323 = smul.addr %s322, 8
        %s324 = scalar_lea.vmem [#allocation2], %s323
        %p325 = pneg %p47
        %p326 = pneg %p44
        %p327 = pneg %p68
        %p328 = pneg %p65
        %p329 = pneg %p89
        %p330 = pneg %p86
        %p331 = pneg %p110
        %p332 = pneg %p107
        %p333 = pneg %p131
        %p334 = pneg %p128
        %p335 = pneg %p152
        %p336 = pneg %p149
        %p337 = pneg %p173
        %p338 = pneg %p170
        %p339 = pneg %p199
        %p340 = pneg %p196
        %s341 = sand.u32 %s186, 1
        %s342 = scalar_lea.sflag [#allocation4], %s341
        %s343 = sand.u32 %s186, 1
        %s344 = smul.addr %s343, 8
        %s345 = scalar_lea.vmem [#allocation10], %s344
        %v346 = vld [vmem:[%s299] sm:$0xff]
        %v347 = vpack.c.bf16 %v346, %v346
        %v348 = vld [vmem:[#allocation5] sm:$0xf]
        %v349 = vld [vmem:[#allocation5 + $0x4] sm:$0xf]
        %v350 = vld [vmem:[#allocation5 + $0x8] sm:$0xf]
        %v351 = vld [vmem:[#allocation5 + $0xc] sm:$0xf]
        %v352 = vld [vmem:[#allocation5 + $0x10] sm:$0xf]
        %v353 = vld [vmem:[#allocation5 + $0x14] sm:$0xf]
        %v354 = vld [vmem:[#allocation5 + $0x18] sm:$0xf]
        %v355 = vld [vmem:[#allocation5 + $0x1c] sm:$0xf]
        %v356 = vld [vmem:[#allocation5 + $0x20] sm:$0xf]
        %v357 = vld [vmem:[#allocation5 + $0x24] sm:$0xf]
        %v358 = vld [vmem:[#allocation5 + $0x28] sm:$0xf]
        %v359 = vld [vmem:[#allocation5 + $0x2c] sm:$0xf]
        %v360 = vld [vmem:[#allocation5 + $0x30] sm:$0xf]
        %v361 = vld [vmem:[#allocation5 + $0x34] sm:$0xf]
        %v362 = vld [vmem:[#allocation5 + $0x38] sm:$0xf]
        %v363 = vld [vmem:[#allocation5 + $0x3c] sm:$0xf]
        %v364 = vld [vmem:[%s2] sm:$0x1]
        %v366 = vperm.slane %v364, 0
        %v384 = vunpack.c.l.b16 %v348
        %v385 = vunpack.c.l.b16 %v349
        %v386 = vunpack.c.l.b16 %v350
        %v387 = vunpack.c.l.b16 %v351
        %v388 = vunpack.c.l.b16 %v352
        %v389 = vunpack.c.l.b16 %v353
        %v390 = vunpack.c.l.b16 %v354
        %v391 = vunpack.c.l.b16 %v355
        %v392 = vunpack.c.l.b16 %v356
        %v393 = vunpack.c.l.b16 %v357
        %v394 = vunpack.c.l.b16 %v358
        %v395 = vunpack.c.l.b16 %v359
        %v396 = vunpack.c.l.b16 %v360
        %v397 = vunpack.c.l.b16 %v361
        %v398 = vunpack.c.l.b16 %v362
        %v399 = vunpack.c.l.b16 %v363
        %v400 = vpack.c.b16 %v385, %v384
        %v401 = vpack.c.b16 %v387, %v386
        %v402 = vpack.c.b16 %v389, %v388
        %v403 = vpack.c.b16 %v391, %v390
        %v404 = vpack.c.b16 %v393, %v392
        %v405 = vpack.c.b16 %v395, %v394
        %v406 = vpack.c.b16 %v397, %v396
        %v407 = vpack.c.b16 %v399, %v398
        %416 = vmatpush.bf16.msra.mxu0 %v407
        %417 = vmatpush.bf16.msra.mxu0 %v406
        %418 = vmatpush.bf16.msra.mxu0 %v405
        %419 = vmatpush.bf16.msra.mxu0 %v404
        %420 = vmatpush.bf16.msra.mxu0 %v403
        %421 = vmatpush.bf16.msra.mxu0 %v402
        %422 = vmatpush.bf16.msra.mxu0 %v401
        %423 = vmatpush.bf16.msra.mxu0 %v400
        %424 = vmatmul.bf16.gmra.mxu0 %v347
        %v425 = vpop.f32.mrf.mxu0
        %v426 = vadd.f32 %v366, %v425
        %v427 = vpop.f32.mrf.mxu0
        %428 = vdwg.mxu0
        %v429 = vtanh.pop %v426
        %v430 = vld [vmem:[#allocation7] sm:$0xf]
        %v431 = vld [vmem:[#allocation7 + $0x4] sm:$0xf]
        %v432 = vld [vmem:[#allocation7 + $0x8] sm:$0xf]
        %v433 = vld [vmem:[#allocation7 + $0xc] sm:$0xf]
        %v434 = vld [vmem:[#allocation7 + $0x10] sm:$0xf]
        %v435 = vld [vmem:[#allocation7 + $0x14] sm:$0xf]
        %v436 = vld [vmem:[#allocation7 + $0x18] sm:$0xf]
        %v437 = vld [vmem:[#allocation7 + $0x1c] sm:$0xf]
        %v438 = vld [vmem:[#allocation7 + $0x20] sm:$0xf]
        %v439 = vld [vmem:[#allocation7 + $0x24] sm:$0xf]
        %v440 = vld [vmem:[#allocation7 + $0x28] sm:$0xf]
        %v441 = vld [vmem:[#allocation7 + $0x2c] sm:$0xf]
        %v442 = vld [vmem:[#allocation7 + $0x30] sm:$0xf]
        %v443 = vld [vmem:[#allocation7 + $0x34] sm:$0xf]
        %v444 = vld [vmem:[#allocation7 + $0x38] sm:$0xf]
        %v445 = vld [vmem:[#allocation7 + $0x3c] sm:$0xf]
        %v446 = vld [vmem:[%s4] sm:$0x1]
        %v447 = vpack.c.bf16 %v429, %v429
        %v449 = vperm.slane %v446, 0
        %v467 = vunpack.c.l.b16 %v430
        %v468 = vunpack.c.l.b16 %v431
        %v469 = vunpack.c.l.b16 %v432
        %v470 = vunpack.c.l.b16 %v433
        %v471 = vunpack.c.l.b16 %v434
        %v472 = vunpack.c.l.b16 %v435
        %v473 = vunpack.c.l.b16 %v436
        %v474 = vunpack.c.l.b16 %v437
        %v475 = vunpack.c.l.b16 %v438
        %v476 = vunpack.c.l.b16 %v439
        %v477 = vunpack.c.l.b16 %v440
        %v478 = vunpack.c.l.b16 %v441
        %v479 = vunpack.c.l.b16 %v442
        %v480 = vunpack.c.l.b16 %v443
        %v481 = vunpack.c.l.b16 %v444
        %v482 = vunpack.c.l.b16 %v445
        %v483 = vpack.c.b16 %v468, %v467
        %v484 = vpack.c.b16 %v470, %v469
        %v485 = vpack.c.b16 %v472, %v471
        %v486 = vpack.c.b16 %v474, %v473
        %v487 = vpack.c.b16 %v476, %v475
        %v488 = vpack.c.b16 %v478, %v477
        %v489 = vpack.c.b16 %v480, %v479
        %v490 = vpack.c.b16 %v482, %v481
        %499 = vmatpush.bf16.msra.mxu0 %v490
        %500 = vmatpush.bf16.msra.mxu0 %v489
        %501 = vmatpush.bf16.msra.mxu0 %v488
        %502 = vmatpush.bf16.msra.mxu0 %v487
        %503 = vmatpush.bf16.msra.mxu0 %v486
        %504 = vmatpush.bf16.msra.mxu0 %v485
        %505 = vmatpush.bf16.msra.mxu0 %v484
        %506 = vmatpush.bf16.msra.mxu0 %v483
        %507 = vmatmul.bf16.gmra.mxu0 %v447
        %v508 = vpop.f32.mrf.mxu0
        %v509 = vadd.f32 %v449, %v508
        %v510 = vpop.f32.mrf.mxu0
        %511 = vdwg.mxu0
        %v512 = vtanh.pop %v509
        %s513 = scalar_lea.vmem [#allocation7], 64
        %v514 = vld [vmem:[%s513] sm:$0xf]
        %v515 = vld [vmem:[%s513 + $0x4] sm:$0xf]
        %v516 = vld [vmem:[%s513 + $0x8] sm:$0xf]
        %v517 = vld [vmem:[%s513 + $0xc] sm:$0xf]
        %v518 = vld [vmem:[%s513 + $0x10] sm:$0xf]
        %v519 = vld [vmem:[%s513 + $0x14] sm:$0xf]
        %v520 = vld [vmem:[%s513 + $0x18] sm:$0xf]
        %v521 = vld [vmem:[%s513 + $0x1c] sm:$0xf]
        %v522 = vld [vmem:[%s513 + $0x20] sm:$0xf]
        %v523 = vld [vmem:[%s513 + $0x24] sm:$0xf]
        %v524 = vld [vmem:[%s513 + $0x28] sm:$0xf]
        %v525 = vld [vmem:[%s513 + $0x2c] sm:$0xf]
        %v526 = vld [vmem:[%s513 + $0x30] sm:$0xf]
        %v527 = vld [vmem:[%s513 + $0x34] sm:$0xf]
        %v528 = vld [vmem:[%s513 + $0x38] sm:$0xf]
        %v529 = vld [vmem:[%s513 + $0x3c] sm:$0xf]
        %s530 = scalar_lea.vmem %s4, 1
        %v531 = vld [vmem:[%s530] sm:$0x1]
        %v532 = vpack.c.bf16 %v512, %v512
        %v534 = vperm.slane %v531, 0
        %v552 = vunpack.c.l.b16 %v514
        %v553 = vunpack.c.l.b16 %v515
        %v554 = vunpack.c.l.b16 %v516
        %v555 = vunpack.c.l.b16 %v517
        %v556 = vunpack.c.l.b16 %v518
        %v557 = vunpack.c.l.b16 %v519
        %v558 = vunpack.c.l.b16 %v520
        %v559 = vunpack.c.l.b16 %v521
        %v560 = vunpack.c.l.b16 %v522
        %v561 = vunpack.c.l.b16 %v523
        %v562 = vunpack.c.l.b16 %v524
        %v563 = vunpack.c.l.b16 %v525
        %v564 = vunpack.c.l.b16 %v526
        %v565 = vunpack.c.l.b16 %v527
        %v566 = vunpack.c.l.b16 %v528
        %v567 = vunpack.c.l.b16 %v529
        %v568 = vpack.c.b16 %v553, %v552
        %v569 = vpack.c.b16 %v555, %v554
        %v570 = vpack.c.b16 %v557, %v556
        %v571 = vpack.c.b16 %v559, %v558
        %v572 = vpack.c.b16 %v561, %v560
        %v573 = vpack.c.b16 %v563, %v562
        %v574 = vpack.c.b16 %v565, %v564
        %v575 = vpack.c.b16 %v567, %v566
        %584 = vmatpush.bf16.msra.mxu0 %v575
        %585 = vmatpush.bf16.msra.mxu0 %v574
        %586 = vmatpush.bf16.msra.mxu0 %v573
        %587 = vmatpush.bf16.msra.mxu0 %v572
        %588 = vmatpush.bf16.msra.mxu0 %v571
        %589 = vmatpush.bf16.msra.mxu0 %v570
        %590 = vmatpush.bf16.msra.mxu0 %v569
        %591 = vmatpush.bf16.msra.mxu0 %v568
        %592 = vmatmul.bf16.gmra.mxu0 %v532
        %v593 = vpop.f32.mrf.mxu0
        %v594 = vadd.f32 %v534, %v593
        %v595 = vpop.f32.mrf.mxu0
        %596 = vdwg.mxu0
        %v597 = vtanh.pop %v594
        %v598 = vpack.c.bf16 %v597, %v597
        %v599 = vld [vmem:[#allocation8] sm:$0xf]
        %v600 = vld [vmem:[#allocation8 + $0x4] sm:$0xf]
        %v601 = vld [vmem:[#allocation8 + $0x8] sm:$0xf]
        %v602 = vld [vmem:[#allocation8 + $0xc] sm:$0xf]
        %v603 = vld [vmem:[#allocation8 + $0x10] sm:$0xf]
        %v604 = vld [vmem:[#allocation8 + $0x14] sm:$0xf]
        %v605 = vld [vmem:[#allocation8 + $0x18] sm:$0xf]
        %v606 = vld [vmem:[#allocation8 + $0x1c] sm:$0xf]
        %v607 = vld [vmem:[#allocation8 + $0x20] sm:$0xf]
        %v608 = vld [vmem:[#allocation8 + $0x24] sm:$0xf]
        %v609 = vld [vmem:[#allocation8 + $0x28] sm:$0xf]
        %v610 = vld [vmem:[#allocation8 + $0x2c] sm:$0xf]
        %v611 = vld [vmem:[#allocation8 + $0x30] sm:$0xf]
        %v612 = vld [vmem:[#allocation8 + $0x34] sm:$0xf]
        %v613 = vld [vmem:[#allocation8 + $0x38] sm:$0xf]
        %v614 = vld [vmem:[#allocation8 + $0x3c] sm:$0xf]
        %v615 = vld [vmem:[%s6] sm:$0x1]
        %v617 = vperm.slane %v615, 0
        %v635 = vunpack.c.l.b16 %v599
        %v636 = vunpack.c.l.b16 %v600
        %v637 = vunpack.c.l.b16 %v601
        %v638 = vunpack.c.l.b16 %v602
        %v639 = vunpack.c.l.b16 %v603
        %v640 = vunpack.c.l.b16 %v604
        %v641 = vunpack.c.l.b16 %v605
        %v642 = vunpack.c.l.b16 %v606
        %v643 = vunpack.c.l.b16 %v607
        %v644 = vunpack.c.l.b16 %v608
        %v645 = vunpack.c.l.b16 %v609
        %v646 = vunpack.c.l.b16 %v610
        %v647 = vunpack.c.l.b16 %v611
        %v648 = vunpack.c.l.b16 %v612
        %v649 = vunpack.c.l.b16 %v613
        %v650 = vunpack.c.l.b16 %v614
        %v651 = vpack.c.b16 %v636, %v635
        %v652 = vpack.c.b16 %v638, %v637
        %v653 = vpack.c.b16 %v640, %v639
        %v654 = vpack.c.b16 %v642, %v641
        %v655 = vpack.c.b16 %v644, %v643
        %v656 = vpack.c.b16 %v646, %v645
        %v657 = vpack.c.b16 %v648, %v647
        %v658 = vpack.c.b16 %v650, %v649
        %667 = vmatpush.bf16.msra.mxu0 %v658
        %668 = vmatpush.bf16.msra.mxu0 %v657
        %669 = vmatpush.bf16.msra.mxu0 %v656
        %670 = vmatpush.bf16.msra.mxu0 %v655
        %671 = vmatpush.bf16.msra.mxu0 %v654
        %672 = vmatpush.bf16.msra.mxu0 %v653
        %673 = vmatpush.bf16.msra.mxu0 %v652
        %674 = vmatpush.bf16.msra.mxu0 %v651
        %675 = vmatmul.bf16.gmra.mxu0 %v598
        %v676 = vpop.f32.mrf.mxu0
        %v677 = vadd.f32 %v617, %v676
        %v678 = vpop.f32.mrf.mxu0
        %679 = vdwg.mxu0
        %680 = vst [vmem:[%s345] sm:$0xff] %v677
        %s681 = sand.u32 %s186, 1
        %s682 = scalar_lea.sflag [#allocation4], %s681
        %s683 = sand.u32 %s186, 1
        %s684 = smul.addr %s683, 8
        %s685 = scalar_lea.vmem [#allocation10], %s684
        // Predicated region
        $region65: #{tpu_custom_call.1} parent=47 // pred_check
          %p686 = pneg %p196
        $region66: #{tpu_custom_call.1} parent=47 // pred_check_branch
          %688 = sbr.rel (%p686) target = $region68
        $region67: #{tpu_custom_call.1} parent=47 // pred_region
          %690 = vsyncadd %s682, 0
          %s691 = smul.addr %s26, 8
          %s692 = scalar_lea.hbm %s7, %s691
          %s694 = sshll.u32 %s685, 4
          %s695 = int_to_ptr.vmem [resolvable:$true] %s694
          %s696 = sshll.u32 %s692, 4
          %s697 = int_to_ptr.hbm [resolvable:$true] %s696
          %699 = dma.vmem_to_hbm [thread:$0]  %s695, 128, %s697, %s682
        $region68: #{tpu_custom_call.1} parent=47 // pred_fallthru
          _
      $region48: #{tpu_custom_call.1} parent=5 // pred_fallthru
        _
      %p700 = scmp.le.s32.totalorder 2, %s21
      // Predicated region
      $region69: #{tpu_custom_call.1} parent=5 // pred_check
        %p701 = pneg %p700
      $region70: #{tpu_custom_call.1} parent=5 // pred_check_branch
        %703 = sbr.rel (%p701) target = $region72
      $region71: #{tpu_custom_call.1} parent=5 // pred_region
        %s704 = ssub.s32 %s21, 2
        // Predicated region
        $region73: #{tpu_custom_call.1} parent=71 // pred_check
          %p705 = pneg %p202
        $region74: #{tpu_custom_call.1} parent=71 // pred_check_branch
          %707 = sbr.rel (%p705) target = $region76
        $region75: #{tpu_custom_call.1} parent=71 // pred_region
          %s708 = sand.u32 %s187, 1
          %s709 = scalar_lea.sflag [#allocation4], %s708
          %s710 = sand.u32 %s187, 1
          %s711 = smul.addr %s710, 8
          %s712 = scalar_lea.vmem [#allocation10], %s711
          %714 = dma.done %s709, 128
        $region76: #{tpu_custom_call.1} parent=71 // pred_fallthru
          _
      $region72: #{tpu_custom_call.1} parent=5 // pred_fallthru
        _
    $region6: #{tpu_custom_call.1} parent=1 // loop_footer
      %s25 = sadd.s32 1, %s21
    $region7: #{tpu_custom_call.1} parent=1 // loop_footer_branch
      %20 = sbr.rel target = $region3
    $region8: #{tpu_custom_call.1} parent=1 // loop_exit
      _
    %715 = vsyncpa [#allocation3], 1
    %s716 = scalar_lea.sflag [#allocation3], 1
    %717 = vsyncpa %s716, 1
    %718 = vsyncpa [#allocation6], 1
    %719 = vsyncpa [#allocation9], 1
    %720 = vsyncpa [#allocation4], 1
    %s721 = scalar_lea.sflag [#allocation4], 1
    %722 = vsyncpa %s721, 1

</llo_original>
